<compile_context>
chip_gen: v5e
topology: v5e:2x2
jax: 0.10.0
libtpu: 0.0.40
codegen_flags: <defaults>
</compile_context>

<pallas_src>
import functools

import jax
import jax.numpy as jnp
from jax.experimental import pallas as pl
from jax.experimental.pallas import tpu as pltpu


def _effnet_mean_head_kernel(f_ref, wt_ref, b_ref, out_ref, *, inv_pool):
    k = pl.program_id(0)

    # f_ref: (N, 4, Wf, TILE_C) channels-last; these are the only feature values
    # the PyTorch head reads (AvgPool2d((4,1)) block 0, selected by cla[:,:,:,0]).
    fb = f_ref[...].astype(jnp.float32)
    # Un-normalized pool (sum over the 4 H rows and all Wf columns); the 1/(4*Wf)
    # normalization is deferred to the finalize step.
    pooled = jnp.sum(jnp.sum(fb, axis=1), axis=1)                  # (N, TILE_C) f32

    # 1x1 conv == matmul over channels; weights are native bf16 on the MXU,
    # accumulation in f32.
    partial = jnp.dot(pooled.astype(wt_ref.dtype), wt_ref[...],
                      preferred_element_type=jnp.float32)          # (N, L) f32

    # out_ref's block index is constant across the (sequential, "arbitrary") grid
    # axis, so it stays resident in VMEM and doubles as the accumulator.
    @pl.when(k == 0)
    def _():
        out_ref[...] = partial

    @pl.when(k > 0)
    def _():
        out_ref[...] += partial

    @pl.when(k == pl.num_programs(0) - 1)
    def _():
        out_ref[...] = out_ref[...] * inv_pool + b_ref[...].astype(jnp.float32)


def effnet_mean_head(features, conv_weight, conv_bias, *, tile_c=1280,
                     weight_dtype=jnp.bfloat16):
    """Pallas implementation of the EffNetMean head (post-backbone).

    features:    (N, C, Hf, Wf)  output of effnet.extract_features
    conv_weight: (L, C)          MeanPooling 1x1 conv weight (squeezed)
    conv_bias:   (L,)            MeanPooling 1x1 conv bias
    returns:     (N, L) float32
    """
    n, c, hf, wf = features.shape
    l = conv_weight.shape[0]
    assert hf >= 4, "EffNetMean head needs at least 4 rows for AvgPool2d((4,1))"

    tile_c = min(tile_c, c)
    assert c % tile_c == 0, "tile_c must divide C (avoids padded HBM copies)"
    num_k = c // tile_c

    # Layout plumbing only (no math): slice to the 4 rows the head reads before
    # transposing (halves the NCHW->NHWC copy traffic); channels-last so C rides
    # the 128-lane axis; weight as (C, L) so the matmul output is lane-dense in L.
    f_cl = jnp.transpose(features[:, :, :4, :], (0, 2, 3, 1))      # (N, 4, Wf, C)
    wt = jnp.transpose(conv_weight, (1, 0)).astype(weight_dtype)   # (C, L)
    b2 = conv_bias.reshape(1, l)

    kernel = functools.partial(_effnet_mean_head_kernel, inv_pool=1.0 / (4.0 * wf))

    f_bytes = features.dtype.itemsize
    w_bytes = jnp.dtype(weight_dtype).itemsize

    return pl.pallas_call(
        kernel,
        out_shape=jax.ShapeDtypeStruct((n, l), jnp.float32),
        grid_spec=pltpu.PrefetchScalarGridSpec(
            num_scalar_prefetch=0,
            grid=(num_k,),
            in_specs=[
                # Only H rows 0..3 are ever DMA'd (block size 4, block index 0).
                pl.BlockSpec((n, 4, wf, tile_c), lambda k: (0, 0, 0, k)),
                pl.BlockSpec((tile_c, l), lambda k: (k, 0)),
                pl.BlockSpec((1, l), lambda k: (0, 0)),
            ],
            out_specs=pl.BlockSpec((n, l), lambda k: (0, 0)),
        ),
        compiler_params=pltpu.CompilerParams(
            dimension_semantics=("arbitrary",),
        ),
        cost_estimate=pl.CostEstimate(
            flops=2 * n * c * l + n * c * 4 * wf,
            transcendentals=0,
            bytes_accessed=(f_bytes * n * 4 * wf * c
                            + w_bytes * c * l
                            + 4 * (n * l + l)),
        ),
    )(f_cl, wt, b2)


def _head_reference(features, conv_weight, conv_bias):
    # Pure-JAX mirror of: AvgPool2d((4,1)) -> transpose(2,3) -> 1x1 conv
    #                      -> [:, :, :, 0] -> mean(dim=2)   (all f32)
    g = jnp.mean(features[:, :, 0:4, :].astype(jnp.float32), axis=(2, 3))   # (N, C)
    return g @ conv_weight.astype(jnp.float32).T + conv_bias.astype(jnp.float32)[None, :]


if __name__ == "__main__":
    key = jax.random.PRNGKey(0)
    k_feat, k_w, k_b = jax.random.split(key, 3)

    # Shapes implied by the module: EfficientNet-b0 emits 1280 feature channels,
    # label_dim defaults to 527; small batch / spatial extent for the demo.
    N, C, HF, WF = 2, 1280, 8, 8
    LABEL_DIM = 527

    features = jax.random.normal(k_feat, (N, C, HF, WF), dtype=jnp.float32)

    # MeanPooling 1x1 conv params, init like init_layer (uniform +- std*sqrt(3)),
    # plus a small nonzero bias to exercise the bias-add path.
    scale = (2.0 / C) ** 0.5 * (3.0 ** 0.5)
    conv_weight = jax.random.uniform(k_w, (LABEL_DIM, C), jnp.float32, -scale, scale)
    conv_bias = 0.01 * jax.random.normal(k_b, (LABEL_DIM,), dtype=jnp.float32)

    out = effnet_mean_head(features, conv_weight, conv_bias)
    out = jax.block_until_ready(out)

    ref = _head_reference(features, conv_weight, conv_bias)
    assert out.shape == (N, LABEL_DIM)
    # bf16 weights on the MXU (f32 accumulation): expected error ~1e-3 absolute.
    assert jnp.allclose(out, ref, atol=1e-2, rtol=1e-2), float(
        jnp.max(jnp.abs(out - ref)))

    print("KERNEL_OK")
</pallas_src>

<mosaic_0001>
module attributes {stable_mosaic.version = 11 : i64} {
  func.func @_effnet_mean_head_kernel(%arg0: i32, %arg1: memref<2x4x8x1280xf32, #tpu.memory_space<vmem>>, %arg2: memref<1280x527xbf16, #tpu.memory_space<vmem>>, %arg3: memref<1x527xf32, #tpu.memory_space<vmem>>, %arg4: memref<2x527xf32, #tpu.memory_space<vmem>>) attributes {dimension_semantics = [#tpu.dimension_semantics<arbitrary>], iteration_bounds = array<i64: 1>, scalar_prefetch = 0 : i64, scratch_operands = 0 : i64, tpu.core_type = #tpu.core_type<tc>, window_params = [{transform_indices = @transform_0, window_bounds = array<i64: 2, 4, 8, 1280>}, {transform_indices = @transform_1, window_bounds = array<i64: 1280, 527>}, {pipeline_mode = #tpu.pipeline_mode<synchronous>, transform_indices = @transform_2, window_bounds = array<i64: 1, 527>}, {pipeline_mode = #tpu.pipeline_mode<synchronous>, transform_indices = @transform_3, window_bounds = array<i64: 2, 527>}]} {
    %c0 = arith.constant 0 : index
    %c0_0 = arith.constant 0 : index
    %c0_1 = arith.constant 0 : index
    %c0_2 = arith.constant 0 : index
    %0 = vector.load %arg1[%c0, %c0_0, %c0_1, %c0_2] : memref<2x4x8x1280xf32, #tpu.memory_space<vmem>>, vector<2x4x8x1280xf32>
    %cst = arith.constant dense<0.000000e+00> : vector<2x8x1280xf32>
    %1 = vector.multi_reduction <add>, %0, %cst [1] : vector<2x4x8x1280xf32> to vector<2x8x1280xf32>
    %cst_3 = arith.constant dense<0.000000e+00> : vector<2x1280xf32>
    %2 = vector.multi_reduction <add>, %1, %cst_3 [1] : vector<2x8x1280xf32> to vector<2x1280xf32>
    %3 = arith.truncf %2 : vector<2x1280xf32> to vector<2x1280xbf16>
    %c0_4 = arith.constant 0 : index
    %c0_5 = arith.constant 0 : index
    %4 = vector.load %arg2[%c0_4, %c0_5] : memref<1280x527xbf16, #tpu.memory_space<vmem>>, vector<1280x527xbf16>
    %cst_6 = arith.constant dense<0.000000e+00> : vector<2x527xf32>
    %5 = tpu.matmul %3, %4, %cst_6 {dimension_numbers = #tpu.dot_dimension_numbers<[1], [0], [0], [1], [0, 0, 1, 1], [], []>} : vector<2x1280xbf16>, vector<1280x527xbf16>, vector<2x527xf32> -> vector<2x527xf32>
    %c0_i32 = arith.constant 0 : i32
    %6 = arith.cmpi eq, %arg0, %c0_i32 : i32
    %7 = arith.extui %6 : i1 to i32
    %c0_i32_7 = arith.constant 0 : i32
    %8 = arith.cmpi ne, %7, %c0_i32_7 : i32
    scf.if %8 {
      %c0_12 = arith.constant 0 : index
      %c0_13 = arith.constant 0 : index
      %15 = vector.load %arg4[%c0_12, %c0_13] : memref<2x527xf32, #tpu.memory_space<vmem>>, vector<2x527xf32>
      tpu.vector_store %arg4[%c0_12, %c0_13], %5 {strides = array<i32>} : memref<2x527xf32, #tpu.memory_space<vmem>>, vector<2x527xf32>,
    } else {
    }
    %c0_i32_8 = arith.constant 0 : i32
    %9 = arith.cmpi sgt, %arg0, %c0_i32_8 : i32
    %10 = arith.extui %9 : i1 to i32
    %c0_i32_9 = arith.constant 0 : i32
    %11 = arith.cmpi ne, %10, %c0_i32_9 : i32
    scf.if %11 {
      %c0_12 = arith.constant 0 : index
      %c0_13 = arith.constant 0 : index
      %15 = vector.load %arg4[%c0_12, %c0_13] : memref<2x527xf32, #tpu.memory_space<vmem>>, vector<2x527xf32>
      %16 = arith.addf %15, %5 : vector<2x527xf32>
      %c0_14 = arith.constant 0 : index
      %c0_15 = arith.constant 0 : index
      %17 = vector.load %arg4[%c0_14, %c0_15] : memref<2x527xf32, #tpu.memory_space<vmem>>, vector<2x527xf32>
      tpu.vector_store %arg4[%c0_14, %c0_15], %16 {strides = array<i32>} : memref<2x527xf32, #tpu.memory_space<vmem>>, vector<2x527xf32>,
    } else {
    }
    %c0_i32_10 = arith.constant 0 : i32
    %12 = arith.cmpi eq, %arg0, %c0_i32_10 : i32
    %13 = arith.extui %12 : i1 to i32
    %c0_i32_11 = arith.constant 0 : i32
    %14 = arith.cmpi ne, %13, %c0_i32_11 : i32
    scf.if %14 {
      %c0_12 = arith.constant 0 : index
      %c0_13 = arith.constant 0 : index
      %15 = vector.load %arg4[%c0_12, %c0_13] : memref<2x527xf32, #tpu.memory_space<vmem>>, vector<2x527xf32>
      %cst_14 = arith.constant 3.125000e-02 : f32
      %16 = vector.broadcast %cst_14 : f32 to vector<2x527xf32>
      %17 = arith.mulf %15, %16 : vector<2x527xf32>
      %c0_15 = arith.constant 0 : index
      %c0_16 = arith.constant 0 : index
      %18 = vector.load %arg3[%c0_15, %c0_16] : memref<1x527xf32, #tpu.memory_space<vmem>>, vector<1x527xf32>
      %19 = vector.broadcast %18 : vector<1x527xf32> to vector<2x527xf32>
      %20 = arith.addf %17, %19 : vector<2x527xf32>
      %c0_17 = arith.constant 0 : index
      %c0_18 = arith.constant 0 : index
      %21 = vector.load %arg4[%c0_17, %c0_18] : memref<2x527xf32, #tpu.memory_space<vmem>>, vector<2x527xf32>
      tpu.vector_store %arg4[%c0_17, %c0_18], %20 {strides = array<i32>} : memref<2x527xf32, #tpu.memory_space<vmem>>, vector<2x527xf32>,
    } else {
    }
    return
  }
  func.func @transform_0(%arg0: i32) -> (i32, i32, i32, i32) {
    %c0_i32 = arith.constant 0 : i32
    %c0_i32_0 = arith.constant 0 : i32
    %c0_i32_1 = arith.constant 0 : i32
    %c0_i32_2 = arith.constant 0 : i32
    return %c0_i32, %c0_i32_0, %c0_i32_1, %arg0 : i32, i32, i32, i32
  }
  func.func @transform_1(%arg0: i32) -> (i32, i32) {
    %c0_i32 = arith.constant 0 : i32
    %c0_i32_0 = arith.constant 0 : i32
    return %arg0, %c0_i32 : i32, i32
  }
  func.func @transform_2(%arg0: i32) -> (i32, i32) {
    %c0_i32 = arith.constant 0 : i32
    %c0_i32_0 = arith.constant 0 : i32
    %c0_i32_1 = arith.constant 0 : i32
    return %c0_i32, %c0_i32_0 : i32, i32
  }
  func.func @transform_3(%arg0: i32) -> (i32, i32) {
    %c0_i32 = arith.constant 0 : i32
    %c0_i32_0 = arith.constant 0 : i32
    %c0_i32_1 = arith.constant 0 : i32
    return %c0_i32, %c0_i32_0 : i32, i32
  }
}

</mosaic_0001>

<llo_original>
// kernel: tpu_custom_call.1
$region0: #{tpu_custom_call.1}
  #allocation0 [shape = 'u32[]', space=smem, size = 0x4, offset = 0x4, fixed_abs, tag = 'smem constant byte address 0x4 - core index']
  #allocation1 [shape = 'u32[72,128]{1,0:T(1,128)}', space=vmem, size = 0x9000, scoped, tag = 'internal scratch']
  %s0 = inlined_call_operand.vmem [shape: f32[2,4,8,1280], index: 0, kind: input, shape index: {}]
  %s1 = inlined_call_operand.vmem [shape: bf16[1280,527], index: 1, kind: input, shape index: {}]
  %s2 = inlined_call_operand.vmem [shape: f32[1,527], index: 2, kind: input, shape index: {}]
  %s3 = inlined_call_operand.hbm [shape: f32[2,527], index: 3, kind: output, shape index: {}]
  %s4 = sld [smem:[#allocation0]]
  $region34: #{tpu_custom_call.1} parent=0
    _
  %s6 = ssub.s32 1, %s4
  %s7 = scalar_select 0, %s6, %s4
  $region1: #{tpu_custom_call.1} parent=0
    #allocation2 [shape = 'u8[5120]{0}', space=vmem, size = 0x1400, scoped, tag = 'output window, operand 0, single buffered']
    #allocation3 [shape = 's32[1]{0}', space=sflag, size = 0x4, scoped, tag = 'scoped memory for tpu_custom_call.1']
    %8 = vsyncpa [#allocation3], 0
    // Predicated region
    $region2: #{tpu_custom_call.1} parent=1 // pred_check
      _
    $region3: #{tpu_custom_call.1} parent=1 // pred_check_branch
      %10 = sbr.rel (0) target = $region5
    $region4: #{tpu_custom_call.1} parent=1 // pred_region
      _
    $region5: #{tpu_custom_call.1} parent=1 // pred_fallthru
      _
    // Predicated region
    $region6: #{tpu_custom_call.1} parent=1 // pred_check
      _
    $region7: #{tpu_custom_call.1} parent=1 // pred_check_branch
      %12 = sbr.rel (0) target = $region9
    $region8: #{tpu_custom_call.1} parent=1 // pred_region
      _
    $region9: #{tpu_custom_call.1} parent=1 // pred_fallthru
      _
    // Predicated region
    $region10: #{tpu_custom_call.1} parent=1 // pred_check
      _
    $region11: #{tpu_custom_call.1} parent=1 // pred_check_branch
      %14 = sbr.rel (0) target = $region13
    $region12: #{tpu_custom_call.1} parent=1 // pred_region
      _
    $region13: #{tpu_custom_call.1} parent=1 // pred_fallthru
      _
    %v15 = vld [vmem:[%s0] sm:$0xff]
    %v16 = vld [vmem:[%s0 + $0x8] sm:$0xff]
    %v17 = vld [vmem:[%s0 + $0x10] sm:$0xff]
    %v18 = vld [vmem:[%s0 + $0x18] sm:$0xff]
    %v19 = vld [vmem:[%s0 + $0x20] sm:$0xff]
    %v20 = vld [vmem:[%s0 + $0x28] sm:$0xff]
    %v21 = vld [vmem:[%s0 + $0x30] sm:$0xff]
    %v22 = vld [vmem:[%s0 + $0x38] sm:$0xff]
    %v23 = vld [vmem:[%s0 + $0x40] sm:$0xff]
    %v24 = vld [vmem:[%s0 + $0x48] sm:$0xff]
    %v25 = vld [vmem:[%s0 + $0x50] sm:$0xff]
    %v26 = vld [vmem:[%s0 + $0x58] sm:$0xff]
    %v27 = vld [vmem:[%s0 + $0x60] sm:$0xff]
    %v28 = vld [vmem:[%s0 + $0x68] sm:$0xff]
    %v29 = vld [vmem:[%s0 + $0x70] sm:$0xff]
    %v30 = vld [vmem:[%s0 + $0x78] sm:$0xff]
    %v31 = vld [vmem:[%s0 + $0x80] sm:$0xff]
    %v32 = vld [vmem:[%s0 + $0x88] sm:$0xff]
    %v33 = vld [vmem:[%s0 + $0x90] sm:$0xff]
    %v34 = vld [vmem:[%s0 + $0x98] sm:$0xff]
    %v35 = vld [vmem:[%s0 + $0xa0] sm:$0xff]
    %v36 = vld [vmem:[%s0 + $0xa8] sm:$0xff]
    %v37 = vld [vmem:[%s0 + $0xb0] sm:$0xff]
    %v38 = vld [vmem:[%s0 + $0xb8] sm:$0xff]
    %v39 = vld [vmem:[%s0 + $0xc0] sm:$0xff]
    %v40 = vld [vmem:[%s0 + $0xc8] sm:$0xff]
    %v41 = vld [vmem:[%s0 + $0xd0] sm:$0xff]
    %v42 = vld [vmem:[%s0 + $0xd8] sm:$0xff]
    %v43 = vld [vmem:[%s0 + $0xe0] sm:$0xff]
    %v44 = vld [vmem:[%s0 + $0xe8] sm:$0xff]
    %v45 = vld [vmem:[%s0 + $0xf0] sm:$0xff]
    %v46 = vld [vmem:[%s0 + $0xf8] sm:$0xff]
    %v47 = vld [vmem:[%s0 + $0x100] sm:$0xff]
    %v48 = vld [vmem:[%s0 + $0x108] sm:$0xff]
    %v49 = vld [vmem:[%s0 + $0x110] sm:$0xff]
    %v50 = vld [vmem:[%s0 + $0x118] sm:$0xff]
    %v51 = vld [vmem:[%s0 + $0x120] sm:$0xff]
    %v52 = vld [vmem:[%s0 + $0x128] sm:$0xff]
    %v53 = vld [vmem:[%s0 + $0x130] sm:$0xff]
    %v54 = vld [vmem:[%s0 + $0x138] sm:$0xff]
    %v55 = vld [vmem:[%s0 + $0x140] sm:$0xff]
    %v56 = vld [vmem:[%s0 + $0x148] sm:$0xff]
    %v57 = vld [vmem:[%s0 + $0x150] sm:$0xff]
    %v58 = vld [vmem:[%s0 + $0x158] sm:$0xff]
    %v59 = vld [vmem:[%s0 + $0x160] sm:$0xff]
    %v60 = vld [vmem:[%s0 + $0x168] sm:$0xff]
    %v61 = vld [vmem:[%s0 + $0x170] sm:$0xff]
    %v62 = vld [vmem:[%s0 + $0x178] sm:$0xff]
    %v63 = vld [vmem:[%s0 + $0x180] sm:$0xff]
    %v64 = vld [vmem:[%s0 + $0x188] sm:$0xff]
    %v65 = vld [vmem:[%s0 + $0x190] sm:$0xff]
    %v66 = vld [vmem:[%s0 + $0x198] sm:$0xff]
    %v67 = vld [vmem:[%s0 + $0x1a0] sm:$0xff]
    %v68 = vld [vmem:[%s0 + $0x1a8] sm:$0xff]
    %v69 = vld [vmem:[%s0 + $0x1b0] sm:$0xff]
    %v70 = vld [vmem:[%s0 + $0x1b8] sm:$0xff]
    %v71 = vld [vmem:[%s0 + $0x1c0] sm:$0xff]
    %v72 = vld [vmem:[%s0 + $0x1c8] sm:$0xff]
    %v73 = vld [vmem:[%s0 + $0x1d0] sm:$0xff]
    %v74 = vld [vmem:[%s0 + $0x1d8] sm:$0xff]
    %v75 = vld [vmem:[%s0 + $0x1e0] sm:$0xff]
    %v76 = vld [vmem:[%s0 + $0x1e8] sm:$0xff]
    %v77 = vld [vmem:[%s0 + $0x1f0] sm:$0xff]
    %v78 = vld [vmem:[%s0 + $0x1f8] sm:$0xff]
    %v79 = vld [vmem:[%s0 + $0x200] sm:$0xff]
    %v80 = vld [vmem:[%s0 + $0x208] sm:$0xff]
    %v81 = vld [vmem:[%s0 + $0x210] sm:$0xff]
    %v82 = vld [vmem:[%s0 + $0x218] sm:$0xff]
    %v83 = vld [vmem:[%s0 + $0x220] sm:$0xff]
    %v84 = vld [vmem:[%s0 + $0x228] sm:$0xff]
    %v85 = vld [vmem:[%s0 + $0x230] sm:$0xff]
    %v86 = vld [vmem:[%s0 + $0x238] sm:$0xff]
    %v87 = vld [vmem:[%s0 + $0x240] sm:$0xff]
    %v88 = vld [vmem:[%s0 + $0x248] sm:$0xff]
    %v89 = vld [vmem:[%s0 + $0x250] sm:$0xff]
    %v90 = vld [vmem:[%s0 + $0x258] sm:$0xff]
    %v91 = vld [vmem:[%s0 + $0x260] sm:$0xff]
    %v92 = vld [vmem:[%s0 + $0x268] sm:$0xff]
    %v93 = vld [vmem:[%s0 + $0x270] sm:$0xff]
    %v94 = vld [vmem:[%s0 + $0x278] sm:$0xff]
    %v95 = vadd.f32 %v15, %v25
    %v96 = vadd.f32 %v95, %v35
    %v97 = vadd.f32 %v96, %v45
    %v98 = vadd.f32 %v16, %v26
    %v99 = vadd.f32 %v98, %v36
    %v100 = vadd.f32 %v99, %v46
    %v101 = vadd.f32 %v17, %v27
    %v102 = vadd.f32 %v101, %v37
    %v103 = vadd.f32 %v102, %v47
    %v104 = vadd.f32 %v18, %v28
    %v105 = vadd.f32 %v104, %v38
    %v106 = vadd.f32 %v105, %v48
    %v107 = vadd.f32 %v19, %v29
    %v108 = vadd.f32 %v107, %v39
    %v109 = vadd.f32 %v108, %v49
    %v110 = vadd.f32 %v20, %v30
    %v111 = vadd.f32 %v110, %v40
    %v112 = vadd.f32 %v111, %v50
    %v113 = vadd.f32 %v21, %v31
    %v114 = vadd.f32 %v113, %v41
    %v115 = vadd.f32 %v114, %v51
    %v116 = vadd.f32 %v22, %v32
    %v117 = vadd.f32 %v116, %v42
    %v118 = vadd.f32 %v117, %v52
    %v119 = vadd.f32 %v23, %v33
    %v120 = vadd.f32 %v119, %v43
    %v121 = vadd.f32 %v120, %v53
    %v122 = vadd.f32 %v24, %v34
    %v123 = vadd.f32 %v122, %v44
    %v124 = vadd.f32 %v123, %v54
    %v125 = vadd.f32 %v55, %v65
    %v126 = vadd.f32 %v125, %v75
    %v127 = vadd.f32 %v126, %v85
    %v128 = vadd.f32 %v56, %v66
    %v129 = vadd.f32 %v128, %v76
    %v130 = vadd.f32 %v129, %v86
    %v131 = vadd.f32 %v57, %v67
    %v132 = vadd.f32 %v131, %v77
    %v133 = vadd.f32 %v132, %v87
    %v134 = vadd.f32 %v58, %v68
    %v135 = vadd.f32 %v134, %v78
    %v136 = vadd.f32 %v135, %v88
    %v137 = vadd.f32 %v59, %v69
    %v138 = vadd.f32 %v137, %v79
    %v139 = vadd.f32 %v138, %v89
    %v140 = vadd.f32 %v60, %v70
    %v141 = vadd.f32 %v140, %v80
    %v142 = vadd.f32 %v141, %v90
    %v143 = vadd.f32 %v61, %v71
    %v144 = vadd.f32 %v143, %v81
    %v145 = vadd.f32 %v144, %v91
    %v146 = vadd.f32 %v62, %v72
    %v147 = vadd.f32 %v146, %v82
    %v148 = vadd.f32 %v147, %v92
    %v149 = vadd.f32 %v63, %v73
    %v150 = vadd.f32 %v149, %v83
    %v151 = vadd.f32 %v150, %v93
    %v152 = vadd.f32 %v64, %v74
    %v153 = vadd.f32 %v152, %v84
    %v154 = vadd.f32 %v153, %v94
    %v155 = vrot.slane %v97, 4
    %v156 = vadd.f32 %v97, %v155
    %v157 = vrot.slane %v156, 2
    %v158 = vadd.f32 %v156, %v157
    %v159 = vrot.slane %v158, 1
    %v160 = vadd.f32 %v158, %v159
    %v161 = vrot.slane %v100, 4
    %v162 = vadd.f32 %v100, %v161
    %v163 = vrot.slane %v162, 2
    %v164 = vadd.f32 %v162, %v163
    %v165 = vrot.slane %v164, 1
    %v166 = vadd.f32 %v164, %v165
    %v167 = vrot.slane %v103, 4
    %v168 = vadd.f32 %v103, %v167
    %v169 = vrot.slane %v168, 2
    %v170 = vadd.f32 %v168, %v169
    %v171 = vrot.slane %v170, 1
    %v172 = vadd.f32 %v170, %v171
    %v173 = vrot.slane %v106, 4
    %v174 = vadd.f32 %v106, %v173
    %v175 = vrot.slane %v174, 2
    %v176 = vadd.f32 %v174, %v175
    %v177 = vrot.slane %v176, 1
    %v178 = vadd.f32 %v176, %v177
    %v179 = vrot.slane %v109, 4
    %v180 = vadd.f32 %v109, %v179
    %v181 = vrot.slane %v180, 2
    %v182 = vadd.f32 %v180, %v181
    %v183 = vrot.slane %v182, 1
    %v184 = vadd.f32 %v182, %v183
    %v185 = vrot.slane %v112, 4
    %v186 = vadd.f32 %v112, %v185
    %v187 = vrot.slane %v186, 2
    %v188 = vadd.f32 %v186, %v187
    %v189 = vrot.slane %v188, 1
    %v190 = vadd.f32 %v188, %v189
    %v191 = vrot.slane %v115, 4
    %v192 = vadd.f32 %v115, %v191
    %v193 = vrot.slane %v192, 2
    %v194 = vadd.f32 %v192, %v193
    %v195 = vrot.slane %v194, 1
    %v196 = vadd.f32 %v194, %v195
    %v197 = vrot.slane %v118, 4
    %v198 = vadd.f32 %v118, %v197
    %v199 = vrot.slane %v198, 2
    %v200 = vadd.f32 %v198, %v199
    %v201 = vrot.slane %v200, 1
    %v202 = vadd.f32 %v200, %v201
    %v203 = vrot.slane %v121, 4
    %v204 = vadd.f32 %v121, %v203
    %v205 = vrot.slane %v204, 2
    %v206 = vadd.f32 %v204, %v205
    %v207 = vrot.slane %v206, 1
    %v208 = vadd.f32 %v206, %v207
    %v209 = vrot.slane %v124, 4
    %v210 = vadd.f32 %v124, %v209
    %v211 = vrot.slane %v210, 2
    %v212 = vadd.f32 %v210, %v211
    %v213 = vrot.slane %v212, 1
    %v214 = vadd.f32 %v212, %v213
    %v215 = vrot.slane %v127, 4
    %v216 = vadd.f32 %v127, %v215
    %v217 = vrot.slane %v216, 2
    %v218 = vadd.f32 %v216, %v217
    %v219 = vrot.slane %v218, 1
    %v220 = vadd.f32 %v218, %v219
    %v221 = vrot.slane %v130, 4
    %v222 = vadd.f32 %v130, %v221
    %v223 = vrot.slane %v222, 2
    %v224 = vadd.f32 %v222, %v223
    %v225 = vrot.slane %v224, 1
    %v226 = vadd.f32 %v224, %v225
    %v227 = vrot.slane %v133, 4
    %v228 = vadd.f32 %v133, %v227
    %v229 = vrot.slane %v228, 2
    %v230 = vadd.f32 %v228, %v229
    %v231 = vrot.slane %v230, 1
    %v232 = vadd.f32 %v230, %v231
    %v233 = vrot.slane %v136, 4
    %v234 = vadd.f32 %v136, %v233
    %v235 = vrot.slane %v234, 2
    %v236 = vadd.f32 %v234, %v235
    %v237 = vrot.slane %v236, 1
    %v238 = vadd.f32 %v236, %v237
    %v239 = vrot.slane %v139, 4
    %v240 = vadd.f32 %v139, %v239
    %v241 = vrot.slane %v240, 2
    %v242 = vadd.f32 %v240, %v241
    %v243 = vrot.slane %v242, 1
    %v244 = vadd.f32 %v242, %v243
    %v245 = vrot.slane %v142, 4
    %v246 = vadd.f32 %v142, %v245
    %v247 = vrot.slane %v246, 2
    %v248 = vadd.f32 %v246, %v247
    %v249 = vrot.slane %v248, 1
    %v250 = vadd.f32 %v248, %v249
    %v251 = vrot.slane %v145, 4
    %v252 = vadd.f32 %v145, %v251
    %v253 = vrot.slane %v252, 2
    %v254 = vadd.f32 %v252, %v253
    %v255 = vrot.slane %v254, 1
    %v256 = vadd.f32 %v254, %v255
    %v257 = vrot.slane %v148, 4
    %v258 = vadd.f32 %v148, %v257
    %v259 = vrot.slane %v258, 2
    %v260 = vadd.f32 %v258, %v259
    %v261 = vrot.slane %v260, 1
    %v262 = vadd.f32 %v260, %v261
    %v263 = vrot.slane %v151, 4
    %v264 = vadd.f32 %v151, %v263
    %v265 = vrot.slane %v264, 2
    %v266 = vadd.f32 %v264, %v265
    %v267 = vrot.slane %v266, 1
    %v268 = vadd.f32 %v266, %v267
    %v269 = vrot.slane %v154, 4
    %v270 = vadd.f32 %v154, %v269
    %v271 = vrot.slane %v270, 2
    %v272 = vadd.f32 %v270, %v271
    %v273 = vrot.slane %v272, 1
    %v274 = vadd.f32 %v272, %v273
    %v275 = vpack.c.bf16 %v160, %v160
    %v276 = vpack.c.bf16 %v166, %v166
    %v277 = vpack.c.bf16 %v172, %v172
    %v278 = vpack.c.bf16 %v178, %v178
    %v279 = vpack.c.bf16 %v184, %v184
    %v280 = vpack.c.bf16 %v190, %v190
    %v281 = vpack.c.bf16 %v196, %v196
    %v282 = vpack.c.bf16 %v202, %v202
    %v283 = vpack.c.bf16 %v208, %v208
    %v284 = vpack.c.bf16 %v214, %v214
    %v285 = vpack.c.bf16 %v220, %v220
    %v286 = vpack.c.bf16 %v226, %v226
    %v287 = vpack.c.bf16 %v232, %v232
    %v288 = vpack.c.bf16 %v238, %v238
    %v289 = vpack.c.bf16 %v244, %v244
    %v290 = vpack.c.bf16 %v250, %v250
    %v291 = vpack.c.bf16 %v256, %v256
    %v292 = vpack.c.bf16 %v262, %v262
    %v293 = vpack.c.bf16 %v268, %v268
    %v294 = vpack.c.bf16 %v274, %v274
    %v295 = vld [vmem:[%s1] sm:$0xff]
    %v296 = vld [vmem:[%s1 + $0x8] sm:$0xff]
    %v297 = vld [vmem:[%s1 + $0x10] sm:$0xf]
    %v298 = vld [vmem:[%s1 + $0x14] sm:$0xff]
    %v299 = vld [vmem:[%s1 + $0x1c] sm:$0xff]
    %v300 = vld [vmem:[%s1 + $0x24] sm:$0xf]
    %v301 = vld [vmem:[%s1 + $0x28] sm:$0xff]
    %v302 = vld [vmem:[%s1 + $0x30] sm:$0xff]
    %v303 = vld [vmem:[%s1 + $0x38] sm:$0xf]
    %v304 = vld [vmem:[%s1 + $0x3c] sm:$0xff]
    %v305 = vld [vmem:[%s1 + $0x44] sm:$0xff]
    %v306 = vld [vmem:[%s1 + $0x4c] sm:$0xf]
    %v307 = vld [vmem:[%s1 + $0x50] sm:$0xff]
    %v308 = vld [vmem:[%s1 + $0x58] sm:$0xff]
    %v309 = vld [vmem:[%s1 + $0x60] sm:$0xf]
    %v310 = vld [vmem:[%s1 + $0x64] sm:$0xff]
    %v311 = vld [vmem:[%s1 + $0x6c] sm:$0xff]
    %v312 = vld [vmem:[%s1 + $0x74] sm:$0xf]
    %v313 = vld [vmem:[%s1 + $0x78] sm:$0xff]
    %v314 = vld [vmem:[%s1 + $0x80] sm:$0xff]
    %v315 = vld [vmem:[%s1 + $0x88] sm:$0xf]
    %v316 = vld [vmem:[%s1 + $0x8c] sm:$0xff]
    %v317 = vld [vmem:[%s1 + $0x94] sm:$0xff]
    %v318 = vld [vmem:[%s1 + $0x9c] sm:$0xf]
    %v319 = vld [vmem:[%s1 + $0xa0] sm:$0xff]
    %v320 = vld [vmem:[%s1 + $0xa8] sm:$0xff]
    %v321 = vld [vmem:[%s1 + $0xb0] sm:$0xf]
    %v322 = vld [vmem:[%s1 + $0xb4] sm:$0xff]
    %v323 = vld [vmem:[%s1 + $0xbc] sm:$0xff]
    %v324 = vld [vmem:[%s1 + $0xc4] sm:$0xf]
    %v325 = vld [vmem:[%s1 + $0xc8] sm:$0xff]
    %v326 = vld [vmem:[%s1 + $0xd0] sm:$0xff]
    %v327 = vld [vmem:[%s1 + $0xd8] sm:$0xf]
    %v328 = vld [vmem:[%s1 + $0xdc] sm:$0xff]
    %v329 = vld [vmem:[%s1 + $0xe4] sm:$0xff]
    %v330 = vld [vmem:[%s1 + $0xec] sm:$0xf]
    %v331 = vld [vmem:[%s1 + $0xf0] sm:$0xff]
    %v332 = vld [vmem:[%s1 + $0xf8] sm:$0xff]
    %v333 = vld [vmem:[%s1 + $0x100] sm:$0xf]
    %v334 = vld [vmem:[%s1 + $0x104] sm:$0xff]
    %v335 = vld [vmem:[%s1 + $0x10c] sm:$0xff]
    %v336 = vld [vmem:[%s1 + $0x114] sm:$0xf]
    %v337 = vld [vmem:[%s1 + $0x118] sm:$0xff]
    %v338 = vld [vmem:[%s1 + $0x120] sm:$0xff]
    %v339 = vld [vmem:[%s1 + $0x128] sm:$0xf]
    %v340 = vld [vmem:[%s1 + $0x12c] sm:$0xff]
    %v341 = vld [vmem:[%s1 + $0x134] sm:$0xff]
    %v342 = vld [vmem:[%s1 + $0x13c] sm:$0xf]
    %v343 = vld [vmem:[%s1 + $0x140] sm:$0xff]
    %v344 = vld [vmem:[%s1 + $0x148] sm:$0xff]
    %v345 = vld [vmem:[%s1 + $0x150] sm:$0xf]
    %v346 = vld [vmem:[%s1 + $0x154] sm:$0xff]
    %v347 = vld [vmem:[%s1 + $0x15c] sm:$0xff]
    %v348 = vld [vmem:[%s1 + $0x164] sm:$0xf]
    %v349 = vld [vmem:[%s1 + $0x168] sm:$0xff]
    %v350 = vld [vmem:[%s1 + $0x170] sm:$0xff]
    %v351 = vld [vmem:[%s1 + $0x178] sm:$0xf]
    %v352 = vld [vmem:[%s1 + $0x17c] sm:$0xff]
    %v353 = vld [vmem:[%s1 + $0x184] sm:$0xff]
    %v354 = vld [vmem:[%s1 + $0x18c] sm:$0xf]
    %v355 = vld [vmem:[%s1 + $0x190] sm:$0xff]
    %v356 = vld [vmem:[%s1 + $0x198] sm:$0xff]
    %v357 = vld [vmem:[%s1 + $0x1a0] sm:$0xf]
    %v358 = vld [vmem:[%s1 + $0x1a4] sm:$0xff]
    %v359 = vld [vmem:[%s1 + $0x1ac] sm:$0xff]
    %v360 = vld [vmem:[%s1 + $0x1b4] sm:$0xf]
    %v361 = vld [vmem:[%s1 + $0x1b8] sm:$0xff]
    %v362 = vld [vmem:[%s1 + $0x1c0] sm:$0xff]
    %v363 = vld [vmem:[%s1 + $0x1c8] sm:$0xf]
    %v364 = vld [vmem:[%s1 + $0x1cc] sm:$0xff]
    %v365 = vld [vmem:[%s1 + $0x1d4] sm:$0xff]
    %v366 = vld [vmem:[%s1 + $0x1dc] sm:$0xf]
    %v367 = vld [vmem:[%s1 + $0x1e0] sm:$0xff]
    %v368 = vld [vmem:[%s1 + $0x1e8] sm:$0xff]
    %v369 = vld [vmem:[%s1 + $0x1f0] sm:$0xf]
    %v370 = vld [vmem:[%s1 + $0x1f4] sm:$0xff]
    %v371 = vld [vmem:[%s1 + $0x1fc] sm:$0xff]
    %v372 = vld [vmem:[%s1 + $0x204] sm:$0xf]
    %v373 = vld [vmem:[%s1 + $0x208] sm:$0xff]
    %v374 = vld [vmem:[%s1 + $0x210] sm:$0xff]
    %v375 = vld [vmem:[%s1 + $0x218] sm:$0xf]
    %v376 = vld [vmem:[%s1 + $0x21c] sm:$0xff]
    %v377 = vld [vmem:[%s1 + $0x224] sm:$0xff]
    %v378 = vld [vmem:[%s1 + $0x22c] sm:$0xf]
    %v379 = vld [vmem:[%s1 + $0x230] sm:$0xff]
    %v380 = vld [vmem:[%s1 + $0x238] sm:$0xff]
    %v381 = vld [vmem:[%s1 + $0x240] sm:$0xf]
    %v382 = vld [vmem:[%s1 + $0x244] sm:$0xff]
    %v383 = vld [vmem:[%s1 + $0x24c] sm:$0xff]
    %v384 = vld [vmem:[%s1 + $0x254] sm:$0xf]
    %v385 = vld [vmem:[%s1 + $0x258] sm:$0xff]
    %v386 = vld [vmem:[%s1 + $0x260] sm:$0xff]
    %v387 = vld [vmem:[%s1 + $0x268] sm:$0xf]
    %v388 = vld [vmem:[%s1 + $0x26c] sm:$0xff]
    %v389 = vld [vmem:[%s1 + $0x274] sm:$0xff]
    %v390 = vld [vmem:[%s1 + $0x27c] sm:$0xf]
    %v391 = vld [vmem:[%s1 + $0x280] sm:$0xff]
    %v392 = vld [vmem:[%s1 + $0x288] sm:$0xff]
    %v393 = vld [vmem:[%s1 + $0x290] sm:$0xf]
    %v394 = vld [vmem:[%s1 + $0x294] sm:$0xff]
    %v395 = vld [vmem:[%s1 + $0x29c] sm:$0xff]
    %v396 = vld [vmem:[%s1 + $0x2a4] sm:$0xf]
    %v397 = vld [vmem:[%s1 + $0x2a8] sm:$0xff]
    %v398 = vld [vmem:[%s1 + $0x2b0] sm:$0xff]
    %v399 = vld [vmem:[%s1 + $0x2b8] sm:$0xf]
    %v400 = vld [vmem:[%s1 + $0x2bc] sm:$0xff]
    %v401 = vld [vmem:[%s1 + $0x2c4] sm:$0xff]
    %v402 = vld [vmem:[%s1 + $0x2cc] sm:$0xf]
    %v403 = vld [vmem:[%s1 + $0x2d0] sm:$0xff]
    %v404 = vld [vmem:[%s1 + $0x2d8] sm:$0xff]
    %v405 = vld [vmem:[%s1 + $0x2e0] sm:$0xf]
    %v406 = vld [vmem:[%s1 + $0x2e4] sm:$0xff]
    %v407 = vld [vmem:[%s1 + $0x2ec] sm:$0xff]
    %v408 = vld [vmem:[%s1 + $0x2f4] sm:$0xf]
    %v409 = vld [vmem:[%s1 + $0x2f8] sm:$0xff]
    %v410 = vld [vmem:[%s1 + $0x300] sm:$0xff]
    %v411 = vld [vmem:[%s1 + $0x308] sm:$0xf]
    %v412 = vld [vmem:[%s1 + $0x30c] sm:$0xff]
    %v413 = vld [vmem:[%s1 + $0x314] sm:$0xff]
    %v414 = vld [vmem:[%s1 + $0x31c] sm:$0xf]
    %v415 = vld [vmem:[%s1 + $0x320] sm:$0xff]
    %v416 = vld [vmem:[%s1 + $0x328] sm:$0xff]
    %v417 = vld [vmem:[%s1 + $0x330] sm:$0xf]
    %v418 = vld [vmem:[%s1 + $0x334] sm:$0xff]
    %v419 = vld [vmem:[%s1 + $0x33c] sm:$0xff]
    %v420 = vld [vmem:[%s1 + $0x344] sm:$0xf]
    %v421 = vld [vmem:[%s1 + $0x348] sm:$0xff]
    %v422 = vld [vmem:[%s1 + $0x350] sm:$0xff]
    %v423 = vld [vmem:[%s1 + $0x358] sm:$0xf]
    %v424 = vld [vmem:[%s1 + $0x35c] sm:$0xff]
    %v425 = vld [vmem:[%s1 + $0x364] sm:$0xff]
    %v426 = vld [vmem:[%s1 + $0x36c] sm:$0xf]
    %v427 = vld [vmem:[%s1 + $0x370] sm:$0xff]
    %v428 = vld [vmem:[%s1 + $0x378] sm:$0xff]
    %v429 = vld [vmem:[%s1 + $0x380] sm:$0xf]
    %v430 = vld [vmem:[%s1 + $0x384] sm:$0xff]
    %v431 = vld [vmem:[%s1 + $0x38c] sm:$0xff]
    %v432 = vld [vmem:[%s1 + $0x394] sm:$0xf]
    %v433 = vld [vmem:[%s1 + $0x398] sm:$0xff]
    %v434 = vld [vmem:[%s1 + $0x3a0] sm:$0xff]
    %v435 = vld [vmem:[%s1 + $0x3a8] sm:$0xf]
    %v436 = vld [vmem:[%s1 + $0x3ac] sm:$0xff]
    %v437 = vld [vmem:[%s1 + $0x3b4] sm:$0xff]
    %v438 = vld [vmem:[%s1 + $0x3bc] sm:$0xf]
    %v439 = vld [vmem:[%s1 + $0x3c0] sm:$0xff]
    %v440 = vld [vmem:[%s1 + $0x3c8] sm:$0xff]
    %v441 = vld [vmem:[%s1 + $0x3d0] sm:$0xf]
    %v442 = vld [vmem:[%s1 + $0x3d4] sm:$0xff]
    %v443 = vld [vmem:[%s1 + $0x3dc] sm:$0xff]
    %v444 = vld [vmem:[%s1 + $0x3e4] sm:$0xf]
    %v445 = vld [vmem:[%s1 + $0x3e8] sm:$0xff]
    %v446 = vld [vmem:[%s1 + $0x3f0] sm:$0xff]
    %v447 = vld [vmem:[%s1 + $0x3f8] sm:$0xf]
    %v448 = vld [vmem:[%s1 + $0x3fc] sm:$0xff]
    %v449 = vld [vmem:[%s1 + $0x404] sm:$0xff]
    %v450 = vld [vmem:[%s1 + $0x40c] sm:$0xf]
    %v451 = vld [vmem:[%s1 + $0x410] sm:$0xff]
    %v452 = vld [vmem:[%s1 + $0x418] sm:$0xff]
    %v453 = vld [vmem:[%s1 + $0x420] sm:$0xf]
    %v454 = vld [vmem:[%s1 + $0x424] sm:$0xff]
    %v455 = vld [vmem:[%s1 + $0x42c] sm:$0xff]
    %v456 = vld [vmem:[%s1 + $0x434] sm:$0xf]
    %v457 = vld [vmem:[%s1 + $0x438] sm:$0xff]
    %v458 = vld [vmem:[%s1 + $0x440] sm:$0xff]
    %v459 = vld [vmem:[%s1 + $0x448] sm:$0xf]
    %v460 = vld [vmem:[%s1 + $0x44c] sm:$0xff]
    %v461 = vld [vmem:[%s1 + $0x454] sm:$0xff]
    %v462 = vld [vmem:[%s1 + $0x45c] sm:$0xf]
    %v463 = vld [vmem:[%s1 + $0x460] sm:$0xff]
    %v464 = vld [vmem:[%s1 + $0x468] sm:$0xff]
    %v465 = vld [vmem:[%s1 + $0x470] sm:$0xf]
    %v466 = vld [vmem:[%s1 + $0x474] sm:$0xff]
    %v467 = vld [vmem:[%s1 + $0x47c] sm:$0xff]
    %v468 = vld [vmem:[%s1 + $0x484] sm:$0xf]
    %v469 = vld [vmem:[%s1 + $0x488] sm:$0xff]
    %v470 = vld [vmem:[%s1 + $0x490] sm:$0xff]
    %v471 = vld [vmem:[%s1 + $0x498] sm:$0xf]
    %v472 = vld [vmem:[%s1 + $0x49c] sm:$0xff]
    %v473 = vld [vmem:[%s1 + $0x4a4] sm:$0xff]
    %v474 = vld [vmem:[%s1 + $0x4ac] sm:$0xf]
    %v475 = vld [vmem:[%s1 + $0x4b0] sm:$0xff]
    %v476 = vld [vmem:[%s1 + $0x4b8] sm:$0xff]
    %v477 = vld [vmem:[%s1 + $0x4c0] sm:$0xf]
    %v478 = vld [vmem:[%s1 + $0x4c4] sm:$0xff]
    %v479 = vld [vmem:[%s1 + $0x4cc] sm:$0xff]
    %v480 = vld [vmem:[%s1 + $0x4d4] sm:$0xf]
    %v481 = vld [vmem:[%s1 + $0x4d8] sm:$0xff]
    %v482 = vld [vmem:[%s1 + $0x4e0] sm:$0xff]
    %v483 = vld [vmem:[%s1 + $0x4e8] sm:$0xf]
    %v484 = vld [vmem:[%s1 + $0x4ec] sm:$0xff]
    %v485 = vld [vmem:[%s1 + $0x4f4] sm:$0xff]
    %v486 = vld [vmem:[%s1 + $0x4fc] sm:$0xf]
    %v487 = vld [vmem:[%s1 + $0x500] sm:$0xff]
    %v488 = vld [vmem:[%s1 + $0x508] sm:$0xff]
    %v489 = vld [vmem:[%s1 + $0x510] sm:$0xf]
    %v490 = vld [vmem:[%s1 + $0x514] sm:$0xff]
    %v491 = vld [vmem:[%s1 + $0x51c] sm:$0xff]
    %v492 = vld [vmem:[%s1 + $0x524] sm:$0xf]
    %v493 = vld [vmem:[%s1 + $0x528] sm:$0xff]
    %v494 = vld [vmem:[%s1 + $0x530] sm:$0xff]
    %v495 = vld [vmem:[%s1 + $0x538] sm:$0xf]
    %v496 = vld [vmem:[%s1 + $0x53c] sm:$0xff]
    %v497 = vld [vmem:[%s1 + $0x544] sm:$0xff]
    %v498 = vld [vmem:[%s1 + $0x54c] sm:$0xf]
    %v499 = vld [vmem:[%s1 + $0x550] sm:$0xff]
    %v500 = vld [vmem:[%s1 + $0x558] sm:$0xff]
    %v501 = vld [vmem:[%s1 + $0x560] sm:$0xf]
    %v502 = vld [vmem:[%s1 + $0x564] sm:$0xff]
    %v503 = vld [vmem:[%s1 + $0x56c] sm:$0xff]
    %v504 = vld [vmem:[%s1 + $0x574] sm:$0xf]
    %v505 = vld [vmem:[%s1 + $0x578] sm:$0xff]
    %v506 = vld [vmem:[%s1 + $0x580] sm:$0xff]
    %v507 = vld [vmem:[%s1 + $0x588] sm:$0xf]
    %v508 = vld [vmem:[%s1 + $0x58c] sm:$0xff]
    %v509 = vld [vmem:[%s1 + $0x594] sm:$0xff]
    %v510 = vld [vmem:[%s1 + $0x59c] sm:$0xf]
    %v511 = vld [vmem:[%s1 + $0x5a0] sm:$0xff]
    %v512 = vld [vmem:[%s1 + $0x5a8] sm:$0xff]
    %v513 = vld [vmem:[%s1 + $0x5b0] sm:$0xf]
    %v514 = vld [vmem:[%s1 + $0x5b4] sm:$0xff]
    %v515 = vld [vmem:[%s1 + $0x5bc] sm:$0xff]
    %v516 = vld [vmem:[%s1 + $0x5c4] sm:$0xf]
    %v517 = vld [vmem:[%s1 + $0x5c8] sm:$0xff]
    %v518 = vld [vmem:[%s1 + $0x5d0] sm:$0xff]
    %v519 = vld [vmem:[%s1 + $0x5d8] sm:$0xf]
    %v520 = vld [vmem:[%s1 + $0x5dc] sm:$0xff]
    %v521 = vld [vmem:[%s1 + $0x5e4] sm:$0xff]
    %v522 = vld [vmem:[%s1 + $0x5ec] sm:$0xf]
    %v523 = vld [vmem:[%s1 + $0x5f0] sm:$0xff]
    %v524 = vld [vmem:[%s1 + $0x5f8] sm:$0xff]
    %v525 = vld [vmem:[%s1 + $0x600] sm:$0xf]
    %v526 = vld [vmem:[%s1 + $0x604] sm:$0xff]
    %v527 = vld [vmem:[%s1 + $0x60c] sm:$0xff]
    %v528 = vld [vmem:[%s1 + $0x614] sm:$0xf]
    %v529 = vld [vmem:[%s1 + $0x618] sm:$0xff]
    %v530 = vld [vmem:[%s1 + $0x620] sm:$0xff]
    %v531 = vld [vmem:[%s1 + $0x628] sm:$0xf]
    %v532 = vld [vmem:[%s1 + $0x62c] sm:$0xff]
    %v533 = vld [vmem:[%s1 + $0x634] sm:$0xff]
    %v534 = vld [vmem:[%s1 + $0x63c] sm:$0xf]
    %v535 = vld [vmem:[%s1 + $0x640] sm:$0xff]
    %v536 = vld [vmem:[%s1 + $0x648] sm:$0xff]
    %v537 = vld [vmem:[%s1 + $0x650] sm:$0xf]
    %v538 = vld [vmem:[%s1 + $0x654] sm:$0xff]
    %v539 = vld [vmem:[%s1 + $0x65c] sm:$0xff]
    %v540 = vld [vmem:[%s1 + $0x664] sm:$0xf]
    %v541 = vld [vmem:[%s1 + $0x668] sm:$0xff]
    %v542 = vld [vmem:[%s1 + $0x670] sm:$0xff]
    %v543 = vld [vmem:[%s1 + $0x678] sm:$0xf]
    %v544 = vld [vmem:[%s1 + $0x67c] sm:$0xff]
    %v545 = vld [vmem:[%s1 + $0x684] sm:$0xff]
    %v546 = vld [vmem:[%s1 + $0x68c] sm:$0xf]
    %v547 = vld [vmem:[%s1 + $0x690] sm:$0xff]
    %v548 = vld [vmem:[%s1 + $0x698] sm:$0xff]
    %v549 = vld [vmem:[%s1 + $0x6a0] sm:$0xf]
    %v550 = vld [vmem:[%s1 + $0x6a4] sm:$0xff]
    %v551 = vld [vmem:[%s1 + $0x6ac] sm:$0xff]
    %v552 = vld [vmem:[%s1 + $0x6b4] sm:$0xf]
    %v553 = vld [vmem:[%s1 + $0x6b8] sm:$0xff]
    %v554 = vld [vmem:[%s1 + $0x6c0] sm:$0xff]
    %v555 = vld [vmem:[%s1 + $0x6c8] sm:$0xf]
    %v556 = vld [vmem:[%s1 + $0x6cc] sm:$0xff]
    %v557 = vld [vmem:[%s1 + $0x6d4] sm:$0xff]
    %v558 = vld [vmem:[%s1 + $0x6dc] sm:$0xf]
    %v559 = vld [vmem:[%s1 + $0x6e0] sm:$0xff]
    %v560 = vld [vmem:[%s1 + $0x6e8] sm:$0xff]
    %v561 = vld [vmem:[%s1 + $0x6f0] sm:$0xf]
    %v562 = vld [vmem:[%s1 + $0x6f4] sm:$0xff]
    %v563 = vld [vmem:[%s1 + $0x6fc] sm:$0xff]
    %v564 = vld [vmem:[%s1 + $0x704] sm:$0xf]
    %v565 = vld [vmem:[%s1 + $0x708] sm:$0xff]
    %v566 = vld [vmem:[%s1 + $0x710] sm:$0xff]
    %v567 = vld [vmem:[%s1 + $0x718] sm:$0xf]
    %v568 = vld [vmem:[%s1 + $0x71c] sm:$0xff]
    %v569 = vld [vmem:[%s1 + $0x724] sm:$0xff]
    %v570 = vld [vmem:[%s1 + $0x72c] sm:$0xf]
    %v571 = vld [vmem:[%s1 + $0x730] sm:$0xff]
    %v572 = vld [vmem:[%s1 + $0x738] sm:$0xff]
    %v573 = vld [vmem:[%s1 + $0x740] sm:$0xf]
    %v574 = vld [vmem:[%s1 + $0x744] sm:$0xff]
    %v575 = vld [vmem:[%s1 + $0x74c] sm:$0xff]
    %v576 = vld [vmem:[%s1 + $0x754] sm:$0xf]
    %v577 = vld [vmem:[%s1 + $0x758] sm:$0xff]
    %v578 = vld [vmem:[%s1 + $0x760] sm:$0xff]
    %v579 = vld [vmem:[%s1 + $0x768] sm:$0xf]
    %v580 = vld [vmem:[%s1 + $0x76c] sm:$0xff]
    %v581 = vld [vmem:[%s1 + $0x774] sm:$0xff]
    %v582 = vld [vmem:[%s1 + $0x77c] sm:$0xf]
    %v583 = vld [vmem:[%s1 + $0x780] sm:$0xff]
    %v584 = vld [vmem:[%s1 + $0x788] sm:$0xff]
    %v585 = vld [vmem:[%s1 + $0x790] sm:$0xf]
    %v586 = vld [vmem:[%s1 + $0x794] sm:$0xff]
    %v587 = vld [vmem:[%s1 + $0x79c] sm:$0xff]
    %v588 = vld [vmem:[%s1 + $0x7a4] sm:$0xf]
    %v589 = vld [vmem:[%s1 + $0x7a8] sm:$0xff]
    %v590 = vld [vmem:[%s1 + $0x7b0] sm:$0xff]
    %v591 = vld [vmem:[%s1 + $0x7b8] sm:$0xf]
    %v592 = vld [vmem:[%s1 + $0x7bc] sm:$0xff]
    %v593 = vld [vmem:[%s1 + $0x7c4] sm:$0xff]
    %v594 = vld [vmem:[%s1 + $0x7cc] sm:$0xf]
    %v595 = vld [vmem:[%s1 + $0x7d0] sm:$0xff]
    %v596 = vld [vmem:[%s1 + $0x7d8] sm:$0xff]
    %v597 = vld [vmem:[%s1 + $0x7e0] sm:$0xf]
    %v598 = vld [vmem:[%s1 + $0x7e4] sm:$0xff]
    %v599 = vld [vmem:[%s1 + $0x7ec] sm:$0xff]
    %v600 = vld [vmem:[%s1 + $0x7f4] sm:$0xf]
    %v601 = vld [vmem:[%s1 + $0x7f8] sm:$0xff]
    %v602 = vld [vmem:[%s1 + $0x800] sm:$0xff]
    %v603 = vld [vmem:[%s1 + $0x808] sm:$0xf]
    %v604 = vld [vmem:[%s1 + $0x80c] sm:$0xff]
    %v605 = vld [vmem:[%s1 + $0x814] sm:$0xff]
    %v606 = vld [vmem:[%s1 + $0x81c] sm:$0xf]
    %v607 = vld [vmem:[%s1 + $0x820] sm:$0xff]
    %v608 = vld [vmem:[%s1 + $0x828] sm:$0xff]
    %v609 = vld [vmem:[%s1 + $0x830] sm:$0xf]
    %v610 = vld [vmem:[%s1 + $0x834] sm:$0xff]
    %v611 = vld [vmem:[%s1 + $0x83c] sm:$0xff]
    %v612 = vld [vmem:[%s1 + $0x844] sm:$0xf]
    %v613 = vld [vmem:[%s1 + $0x848] sm:$0xff]
    %v614 = vld [vmem:[%s1 + $0x850] sm:$0xff]
    %v615 = vld [vmem:[%s1 + $0x858] sm:$0xf]
    %v616 = vld [vmem:[%s1 + $0x85c] sm:$0xff]
    %v617 = vld [vmem:[%s1 + $0x864] sm:$0xff]
    %v618 = vld [vmem:[%s1 + $0x86c] sm:$0xf]
    %v619 = vld [vmem:[%s1 + $0x870] sm:$0xff]
    %v620 = vld [vmem:[%s1 + $0x878] sm:$0xff]
    %v621 = vld [vmem:[%s1 + $0x880] sm:$0xf]
    %v622 = vld [vmem:[%s1 + $0x884] sm:$0xff]
    %v623 = vld [vmem:[%s1 + $0x88c] sm:$0xff]
    %v624 = vld [vmem:[%s1 + $0x894] sm:$0xf]
    %v625 = vld [vmem:[%s1 + $0x898] sm:$0xff]
    %v626 = vld [vmem:[%s1 + $0x8a0] sm:$0xff]
    %v627 = vld [vmem:[%s1 + $0x8a8] sm:$0xf]
    %v628 = vld [vmem:[%s1 + $0x8ac] sm:$0xff]
    %v629 = vld [vmem:[%s1 + $0x8b4] sm:$0xff]
    %v630 = vld [vmem:[%s1 + $0x8bc] sm:$0xf]
    %v631 = vld [vmem:[%s1 + $0x8c0] sm:$0xff]
    %v632 = vld [vmem:[%s1 + $0x8c8] sm:$0xff]
    %v633 = vld [vmem:[%s1 + $0x8d0] sm:$0xf]
    %v634 = vld [vmem:[%s1 + $0x8d4] sm:$0xff]
    %v635 = vld [vmem:[%s1 + $0x8dc] sm:$0xff]
    %v636 = vld [vmem:[%s1 + $0x8e4] sm:$0xf]
    %v637 = vld [vmem:[%s1 + $0x8e8] sm:$0xff]
    %v638 = vld [vmem:[%s1 + $0x8f0] sm:$0xff]
    %v639 = vld [vmem:[%s1 + $0x8f8] sm:$0xf]
    %v640 = vld [vmem:[%s1 + $0x8fc] sm:$0xff]
    %v641 = vld [vmem:[%s1 + $0x904] sm:$0xff]
    %v642 = vld [vmem:[%s1 + $0x90c] sm:$0xf]
    %v643 = vld [vmem:[%s1 + $0x910] sm:$0xff]
    %v644 = vld [vmem:[%s1 + $0x918] sm:$0xff]
    %v645 = vld [vmem:[%s1 + $0x920] sm:$0xf]
    %v646 = vld [vmem:[%s1 + $0x924] sm:$0xff]
    %v647 = vld [vmem:[%s1 + $0x92c] sm:$0xff]
    %v648 = vld [vmem:[%s1 + $0x934] sm:$0xf]
    %v649 = vld [vmem:[%s1 + $0x938] sm:$0xff]
    %v650 = vld [vmem:[%s1 + $0x940] sm:$0xff]
    %v651 = vld [vmem:[%s1 + $0x948] sm:$0xf]
    %v652 = vld [vmem:[%s1 + $0x94c] sm:$0xff]
    %v653 = vld [vmem:[%s1 + $0x954] sm:$0xff]
    %v654 = vld [vmem:[%s1 + $0x95c] sm:$0xf]
    %v655 = vld [vmem:[%s1 + $0x960] sm:$0xff]
    %v656 = vld [vmem:[%s1 + $0x968] sm:$0xff]
    %v657 = vld [vmem:[%s1 + $0x970] sm:$0xf]
    %v658 = vld [vmem:[%s1 + $0x974] sm:$0xff]
    %v659 = vld [vmem:[%s1 + $0x97c] sm:$0xff]
    %v660 = vld [vmem:[%s1 + $0x984] sm:$0xf]
    %v661 = vld [vmem:[%s1 + $0x988] sm:$0xff]
    %v662 = vld [vmem:[%s1 + $0x990] sm:$0xff]
    %v663 = vld [vmem:[%s1 + $0x998] sm:$0xf]
    %v664 = vld [vmem:[%s1 + $0x99c] sm:$0xff]
    %v665 = vld [vmem:[%s1 + $0x9a4] sm:$0xff]
    %v666 = vld [vmem:[%s1 + $0x9ac] sm:$0xf]
    %v667 = vld [vmem:[%s1 + $0x9b0] sm:$0xff]
    %v668 = vld [vmem:[%s1 + $0x9b8] sm:$0xff]
    %v669 = vld [vmem:[%s1 + $0x9c0] sm:$0xf]
    %v670 = vld [vmem:[%s1 + $0x9c4] sm:$0xff]
    %v671 = vld [vmem:[%s1 + $0x9cc] sm:$0xff]
    %v672 = vld [vmem:[%s1 + $0x9d4] sm:$0xf]
    %v673 = vld [vmem:[%s1 + $0x9d8] sm:$0xff]
    %v674 = vld [vmem:[%s1 + $0x9e0] sm:$0xff]
    %v675 = vld [vmem:[%s1 + $0x9e8] sm:$0xf]
    %v676 = vld [vmem:[%s1 + $0x9ec] sm:$0xff]
    %v677 = vld [vmem:[%s1 + $0x9f4] sm:$0xff]
    %v678 = vld [vmem:[%s1 + $0x9fc] sm:$0xf]
    %v679 = vld [vmem:[%s1 + $0xa00] sm:$0xff]
    %v680 = vld [vmem:[%s1 + $0xa08] sm:$0xff]
    %v681 = vld [vmem:[%s1 + $0xa10] sm:$0xf]
    %v682 = vld [vmem:[%s1 + $0xa14] sm:$0xff]
    %v683 = vld [vmem:[%s1 + $0xa1c] sm:$0xff]
    %v684 = vld [vmem:[%s1 + $0xa24] sm:$0xf]
    %v685 = vld [vmem:[%s1 + $0xa28] sm:$0xff]
    %v686 = vld [vmem:[%s1 + $0xa30] sm:$0xff]
    %v687 = vld [vmem:[%s1 + $0xa38] sm:$0xf]
    %v688 = vld [vmem:[%s1 + $0xa3c] sm:$0xff]
    %v689 = vld [vmem:[%s1 + $0xa44] sm:$0xff]
    %v690 = vld [vmem:[%s1 + $0xa4c] sm:$0xf]
    %v691 = vld [vmem:[%s1 + $0xa50] sm:$0xff]
    %v692 = vld [vmem:[%s1 + $0xa58] sm:$0xff]
    %v693 = vld [vmem:[%s1 + $0xa60] sm:$0xf]
    %v694 = vld [vmem:[%s1 + $0xa64] sm:$0xff]
    %v695 = vld [vmem:[%s1 + $0xa6c] sm:$0xff]
    %v696 = vld [vmem:[%s1 + $0xa74] sm:$0xf]
    %v697 = vld [vmem:[%s1 + $0xa78] sm:$0xff]
    %v698 = vld [vmem:[%s1 + $0xa80] sm:$0xff]
    %v699 = vld [vmem:[%s1 + $0xa88] sm:$0xf]
    %v700 = vld [vmem:[%s1 + $0xa8c] sm:$0xff]
    %v701 = vld [vmem:[%s1 + $0xa94] sm:$0xff]
    %v702 = vld [vmem:[%s1 + $0xa9c] sm:$0xf]
    %v703 = vld [vmem:[%s1 + $0xaa0] sm:$0xff]
    %v704 = vld [vmem:[%s1 + $0xaa8] sm:$0xff]
    %v705 = vld [vmem:[%s1 + $0xab0] sm:$0xf]
    %v706 = vld [vmem:[%s1 + $0xab4] sm:$0xff]
    %v707 = vld [vmem:[%s1 + $0xabc] sm:$0xff]
    %v708 = vld [vmem:[%s1 + $0xac4] sm:$0xf]
    %v709 = vld [vmem:[%s1 + $0xac8] sm:$0xff]
    %v710 = vld [vmem:[%s1 + $0xad0] sm:$0xff]
    %v711 = vld [vmem:[%s1 + $0xad8] sm:$0xf]
    %v712 = vld [vmem:[%s1 + $0xadc] sm:$0xff]
    %v713 = vld [vmem:[%s1 + $0xae4] sm:$0xff]
    %v714 = vld [vmem:[%s1 + $0xaec] sm:$0xf]
    %v715 = vld [vmem:[%s1 + $0xaf0] sm:$0xff]
    %v716 = vld [vmem:[%s1 + $0xaf8] sm:$0xff]
    %v717 = vld [vmem:[%s1 + $0xb00] sm:$0xf]
    %v718 = vld [vmem:[%s1 + $0xb04] sm:$0xff]
    %v719 = vld [vmem:[%s1 + $0xb0c] sm:$0xff]
    %v720 = vld [vmem:[%s1 + $0xb14] sm:$0xf]
    %v721 = vld [vmem:[%s1 + $0xb18] sm:$0xff]
    %v722 = vld [vmem:[%s1 + $0xb20] sm:$0xff]
    %v723 = vld [vmem:[%s1 + $0xb28] sm:$0xf]
    %v724 = vld [vmem:[%s1 + $0xb2c] sm:$0xff]
    %v725 = vld [vmem:[%s1 + $0xb34] sm:$0xff]
    %v726 = vld [vmem:[%s1 + $0xb3c] sm:$0xf]
    %v727 = vld [vmem:[%s1 + $0xb40] sm:$0xff]
    %v728 = vld [vmem:[%s1 + $0xb48] sm:$0xff]
    %v729 = vld [vmem:[%s1 + $0xb50] sm:$0xf]
    %v730 = vld [vmem:[%s1 + $0xb54] sm:$0xff]
    %v731 = vld [vmem:[%s1 + $0xb5c] sm:$0xff]
    %v732 = vld [vmem:[%s1 + $0xb64] sm:$0xf]
    %v733 = vld [vmem:[%s1 + $0xb68] sm:$0xff]
    %v734 = vld [vmem:[%s1 + $0xb70] sm:$0xff]
    %v735 = vld [vmem:[%s1 + $0xb78] sm:$0xf]
    %v736 = vld [vmem:[%s1 + $0xb7c] sm:$0xff]
    %v737 = vld [vmem:[%s1 + $0xb84] sm:$0xff]
    %v738 = vld [vmem:[%s1 + $0xb8c] sm:$0xf]
    %v739 = vld [vmem:[%s1 + $0xb90] sm:$0xff]
    %v740 = vld [vmem:[%s1 + $0xb98] sm:$0xff]
    %v741 = vld [vmem:[%s1 + $0xba0] sm:$0xf]
    %v742 = vld [vmem:[%s1 + $0xba4] sm:$0xff]
    %v743 = vld [vmem:[%s1 + $0xbac] sm:$0xff]
    %v744 = vld [vmem:[%s1 + $0xbb4] sm:$0xf]
    %v745 = vld [vmem:[%s1 + $0xbb8] sm:$0xff]
    %v746 = vld [vmem:[%s1 + $0xbc0] sm:$0xff]
    %v747 = vld [vmem:[%s1 + $0xbc8] sm:$0xf]
    %v748 = vld [vmem:[%s1 + $0xbcc] sm:$0xff]
    %v749 = vld [vmem:[%s1 + $0xbd4] sm:$0xff]
    %v750 = vld [vmem:[%s1 + $0xbdc] sm:$0xf]
    %v751 = vld [vmem:[%s1 + $0xbe0] sm:$0xff]
    %v752 = vld [vmem:[%s1 + $0xbe8] sm:$0xff]
    %v753 = vld [vmem:[%s1 + $0xbf0] sm:$0xf]
    %v754 = vld [vmem:[%s1 + $0xbf4] sm:$0xff]
    %v755 = vld [vmem:[%s1 + $0xbfc] sm:$0xff]
    %v756 = vld [vmem:[%s1 + $0xc04] sm:$0xf]
    %v757 = vld [vmem:[%s1 + $0xc08] sm:$0xff]
    %v758 = vld [vmem:[%s1 + $0xc10] sm:$0xff]
    %v759 = vld [vmem:[%s1 + $0xc18] sm:$0xf]
    %v760 = vld [vmem:[%s1 + $0xc1c] sm:$0xff]
    %v761 = vld [vmem:[%s1 + $0xc24] sm:$0xff]
    %v762 = vld [vmem:[%s1 + $0xc2c] sm:$0xf]
    %v763 = vld [vmem:[%s1 + $0xc30] sm:$0xff]
    %v764 = vld [vmem:[%s1 + $0xc38] sm:$0xff]
    %v765 = vld [vmem:[%s1 + $0xc40] sm:$0xf]
    %v766 = vld [vmem:[%s1 + $0xc44] sm:$0xff]
    %v767 = vld [vmem:[%s1 + $0xc4c] sm:$0xff]
    %v768 = vld [vmem:[%s1 + $0xc54] sm:$0xf]
    %v769 = vld [vmem:[%s1 + $0xc58] sm:$0xff]
    %v770 = vld [vmem:[%s1 + $0xc60] sm:$0xff]
    %v771 = vld [vmem:[%s1 + $0xc68] sm:$0xf]
    %v772 = vld [vmem:[%s1 + $0xc6c] sm:$0xff]
    %v773 = vld [vmem:[%s1 + $0xc74] sm:$0xff]
    %v774 = vld [vmem:[%s1 + $0xc7c] sm:$0xf]
    %v795 = vunpack.c.l.b16 %v275
    %v796 = vunpack.c.l.b16 %v276
    %v797 = vunpack.c.l.b16 %v277
    %v798 = vunpack.c.l.b16 %v278
    %v799 = vunpack.c.l.b16 %v279
    %v800 = vunpack.c.l.b16 %v280
    %v801 = vunpack.c.l.b16 %v281
    %v802 = vunpack.c.l.b16 %v282
    %v803 = vunpack.c.l.b16 %v283
    %v804 = vunpack.c.l.b16 %v284
    %v805 = vunpack.c.l.b16 %v285
    %v806 = vunpack.c.l.b16 %v286
    %v807 = vunpack.c.l.b16 %v287
    %v808 = vunpack.c.l.b16 %v288
    %v809 = vunpack.c.l.b16 %v289
    %v810 = vunpack.c.l.b16 %v290
    %v811 = vunpack.c.l.b16 %v291
    %v812 = vunpack.c.l.b16 %v292
    %v813 = vunpack.c.l.b16 %v293
    %v814 = vunpack.c.l.b16 %v294
    %vm815 = vcmask 1041409
    %v816 = vsel %vm815, %v805, %v795
    %v817 = vsel %vm815, %v806, %v796
    %v818 = vsel %vm815, %v807, %v797
    %v819 = vsel %vm815, %v808, %v798
    %v820 = vsel %vm815, %v809, %v799
    %v821 = vsel %vm815, %v810, %v800
    %v822 = vsel %vm815, %v811, %v801
    %v823 = vsel %vm815, %v812, %v802
    %v824 = vsel %vm815, %v813, %v803
    %v825 = vsel %vm815, %v814, %v804
    %v826 = vpack.c.b16 %v816, %v816
    %v827 = vpack.c.b16 %v817, %v817
    %v828 = vpack.c.b16 %v818, %v818
    %v829 = vpack.c.b16 %v819, %v819
    %v830 = vpack.c.b16 %v820, %v820
    %v831 = vpack.c.b16 %v821, %v821
    %v832 = vpack.c.b16 %v822, %v822
    %v833 = vpack.c.b16 %v823, %v823
    %v834 = vpack.c.b16 %v824, %v824
    %v835 = vpack.c.b16 %v825, %v825
    %v1326 = vunpack.c.l.b16 %v295
    %v1327 = vunpack.c.h.b16 %v295
    %v1328 = vunpack.c.l.b16 %v296
    %v1329 = vunpack.c.h.b16 %v296
    %v1330 = vunpack.c.l.b16 %v297
    %v1331 = vunpack.c.l.b16 %v298
    %v1332 = vunpack.c.h.b16 %v298
    %v1333 = vunpack.c.l.b16 %v299
    %v1334 = vunpack.c.h.b16 %v299
    %v1335 = vunpack.c.l.b16 %v300
    %v1336 = vunpack.c.l.b16 %v301
    %v1337 = vunpack.c.h.b16 %v301
    %v1338 = vunpack.c.l.b16 %v302
    %v1339 = vunpack.c.h.b16 %v302
    %v1340 = vunpack.c.l.b16 %v303
    %v1341 = vunpack.c.l.b16 %v304
    %v1342 = vunpack.c.h.b16 %v304
    %v1343 = vunpack.c.l.b16 %v305
    %v1344 = vunpack.c.h.b16 %v305
    %v1345 = vunpack.c.l.b16 %v306
    %v1346 = vunpack.c.l.b16 %v307
    %v1347 = vunpack.c.h.b16 %v307
    %v1348 = vunpack.c.l.b16 %v308
    %v1349 = vunpack.c.h.b16 %v308
    %v1350 = vunpack.c.l.b16 %v309
    %v1351 = vunpack.c.l.b16 %v310
    %v1352 = vunpack.c.h.b16 %v310
    %v1353 = vunpack.c.l.b16 %v311
    %v1354 = vunpack.c.h.b16 %v311
    %v1355 = vunpack.c.l.b16 %v312
    %v1356 = vunpack.c.l.b16 %v313
    %v1357 = vunpack.c.h.b16 %v313
    %v1358 = vunpack.c.l.b16 %v314
    %v1359 = vunpack.c.h.b16 %v314
    %v1360 = vunpack.c.l.b16 %v315
    %v1361 = vunpack.c.l.b16 %v316
    %v1362 = vunpack.c.h.b16 %v316
    %v1363 = vunpack.c.l.b16 %v317
    %v1364 = vunpack.c.h.b16 %v317
    %v1365 = vunpack.c.l.b16 %v318
    %v1366 = vunpack.c.l.b16 %v319
    %v1367 = vunpack.c.h.b16 %v319
    %v1368 = vunpack.c.l.b16 %v320
    %v1369 = vunpack.c.h.b16 %v320
    %v1370 = vunpack.c.l.b16 %v321
    %v1371 = vunpack.c.l.b16 %v322
    %v1372 = vunpack.c.h.b16 %v322
    %v1373 = vunpack.c.l.b16 %v323
    %v1374 = vunpack.c.h.b16 %v323
    %v1375 = vunpack.c.l.b16 %v324
    %v1376 = vunpack.c.l.b16 %v325
    %v1377 = vunpack.c.h.b16 %v325
    %v1378 = vunpack.c.l.b16 %v326
    %v1379 = vunpack.c.h.b16 %v326
    %v1380 = vunpack.c.l.b16 %v327
    %v1381 = vunpack.c.l.b16 %v328
    %v1382 = vunpack.c.h.b16 %v328
    %v1383 = vunpack.c.l.b16 %v329
    %v1384 = vunpack.c.h.b16 %v329
    %v1385 = vunpack.c.l.b16 %v330
    %v1386 = vunpack.c.l.b16 %v331
    %v1387 = vunpack.c.h.b16 %v331
    %v1388 = vunpack.c.l.b16 %v332
    %v1389 = vunpack.c.h.b16 %v332
    %v1390 = vunpack.c.l.b16 %v333
    %v1391 = vunpack.c.l.b16 %v334
    %v1392 = vunpack.c.h.b16 %v334
    %v1393 = vunpack.c.l.b16 %v335
    %v1394 = vunpack.c.h.b16 %v335
    %v1395 = vunpack.c.l.b16 %v336
    %v1396 = vunpack.c.l.b16 %v337
    %v1397 = vunpack.c.h.b16 %v337
    %v1398 = vunpack.c.l.b16 %v338
    %v1399 = vunpack.c.h.b16 %v338
    %v1400 = vunpack.c.l.b16 %v339
    %v1401 = vunpack.c.l.b16 %v340
    %v1402 = vunpack.c.h.b16 %v340
    %v1403 = vunpack.c.l.b16 %v341
    %v1404 = vunpack.c.h.b16 %v341
    %v1405 = vunpack.c.l.b16 %v342
    %v1406 = vunpack.c.l.b16 %v343
    %v1407 = vunpack.c.h.b16 %v343
    %v1408 = vunpack.c.l.b16 %v344
    %v1409 = vunpack.c.h.b16 %v344
    %v1410 = vunpack.c.l.b16 %v345
    %v1411 = vunpack.c.l.b16 %v346
    %v1412 = vunpack.c.h.b16 %v346
    %v1413 = vunpack.c.l.b16 %v347
    %v1414 = vunpack.c.h.b16 %v347
    %v1415 = vunpack.c.l.b16 %v348
    %v1416 = vunpack.c.l.b16 %v349
    %v1417 = vunpack.c.h.b16 %v349
    %v1418 = vunpack.c.l.b16 %v350
    %v1419 = vunpack.c.h.b16 %v350
    %v1420 = vunpack.c.l.b16 %v351
    %v1421 = vunpack.c.l.b16 %v352
    %v1422 = vunpack.c.h.b16 %v352
    %v1423 = vunpack.c.l.b16 %v353
    %v1424 = vunpack.c.h.b16 %v353
    %v1425 = vunpack.c.l.b16 %v354
    %v1426 = vunpack.c.l.b16 %v355
    %v1427 = vunpack.c.h.b16 %v355
    %v1428 = vunpack.c.l.b16 %v356
    %v1429 = vunpack.c.h.b16 %v356
    %v1430 = vunpack.c.l.b16 %v357
    %v1431 = vunpack.c.l.b16 %v358
    %v1432 = vunpack.c.h.b16 %v358
    %v1433 = vunpack.c.l.b16 %v359
    %v1434 = vunpack.c.h.b16 %v359
    %v1435 = vunpack.c.l.b16 %v360
    %v1436 = vunpack.c.l.b16 %v361
    %v1437 = vunpack.c.h.b16 %v361
    %v1438 = vunpack.c.l.b16 %v362
    %v1439 = vunpack.c.h.b16 %v362
    %v1440 = vunpack.c.l.b16 %v363
    %v1441 = vunpack.c.l.b16 %v364
    %v1442 = vunpack.c.h.b16 %v364
    %v1443 = vunpack.c.l.b16 %v365
    %v1444 = vunpack.c.h.b16 %v365
    %v1445 = vunpack.c.l.b16 %v366
    %v1446 = vunpack.c.l.b16 %v367
    %v1447 = vunpack.c.h.b16 %v367
    %v1448 = vunpack.c.l.b16 %v368
    %v1449 = vunpack.c.h.b16 %v368
    %v1450 = vunpack.c.l.b16 %v369
    %v1451 = vunpack.c.l.b16 %v370
    %v1452 = vunpack.c.h.b16 %v370
    %v1453 = vunpack.c.l.b16 %v371
    %v1454 = vunpack.c.h.b16 %v371
    %v1455 = vunpack.c.l.b16 %v372
    %v1456 = vunpack.c.l.b16 %v373
    %v1457 = vunpack.c.h.b16 %v373
    %v1458 = vunpack.c.l.b16 %v374
    %v1459 = vunpack.c.h.b16 %v374
    %v1460 = vunpack.c.l.b16 %v375
    %v1461 = vunpack.c.l.b16 %v376
    %v1462 = vunpack.c.h.b16 %v376
    %v1463 = vunpack.c.l.b16 %v377
    %v1464 = vunpack.c.h.b16 %v377
    %v1465 = vunpack.c.l.b16 %v378
    %v1466 = vunpack.c.l.b16 %v379
    %v1467 = vunpack.c.h.b16 %v379
    %v1468 = vunpack.c.l.b16 %v380
    %v1469 = vunpack.c.h.b16 %v380
    %v1470 = vunpack.c.l.b16 %v381
    %v1471 = vunpack.c.l.b16 %v382
    %v1472 = vunpack.c.h.b16 %v382
    %v1473 = vunpack.c.l.b16 %v383
    %v1474 = vunpack.c.h.b16 %v383
    %v1475 = vunpack.c.l.b16 %v384
    %v1476 = vunpack.c.l.b16 %v385
    %v1477 = vunpack.c.h.b16 %v385
    %v1478 = vunpack.c.l.b16 %v386
    %v1479 = vunpack.c.h.b16 %v386
    %v1480 = vunpack.c.l.b16 %v387
    %v1481 = vunpack.c.l.b16 %v388
    %v1482 = vunpack.c.h.b16 %v388
    %v1483 = vunpack.c.l.b16 %v389
    %v1484 = vunpack.c.h.b16 %v389
    %v1485 = vunpack.c.l.b16 %v390
    %v1486 = vunpack.c.l.b16 %v391
    %v1487 = vunpack.c.h.b16 %v391
    %v1488 = vunpack.c.l.b16 %v392
    %v1489 = vunpack.c.h.b16 %v392
    %v1490 = vunpack.c.l.b16 %v393
    %v1491 = vunpack.c.l.b16 %v394
    %v1492 = vunpack.c.h.b16 %v394
    %v1493 = vunpack.c.l.b16 %v395
    %v1494 = vunpack.c.h.b16 %v395
    %v1495 = vunpack.c.l.b16 %v396
    %v1496 = vunpack.c.l.b16 %v397
    %v1497 = vunpack.c.h.b16 %v397
    %v1498 = vunpack.c.l.b16 %v398
    %v1499 = vunpack.c.h.b16 %v398
    %v1500 = vunpack.c.l.b16 %v399
    %v1501 = vunpack.c.l.b16 %v400
    %v1502 = vunpack.c.h.b16 %v400
    %v1503 = vunpack.c.l.b16 %v401
    %v1504 = vunpack.c.h.b16 %v401
    %v1505 = vunpack.c.l.b16 %v402
    %v1506 = vunpack.c.l.b16 %v403
    %v1507 = vunpack.c.h.b16 %v403
    %v1508 = vunpack.c.l.b16 %v404
    %v1509 = vunpack.c.h.b16 %v404
    %v1510 = vunpack.c.l.b16 %v405
    %v1511 = vunpack.c.l.b16 %v406
    %v1512 = vunpack.c.h.b16 %v406
    %v1513 = vunpack.c.l.b16 %v407
    %v1514 = vunpack.c.h.b16 %v407
    %v1515 = vunpack.c.l.b16 %v408
    %v1516 = vunpack.c.l.b16 %v409
    %v1517 = vunpack.c.h.b16 %v409
    %v1518 = vunpack.c.l.b16 %v410
    %v1519 = vunpack.c.h.b16 %v410
    %v1520 = vunpack.c.l.b16 %v411
    %v1521 = vunpack.c.l.b16 %v412
    %v1522 = vunpack.c.h.b16 %v412
    %v1523 = vunpack.c.l.b16 %v413
    %v1524 = vunpack.c.h.b16 %v413
    %v1525 = vunpack.c.l.b16 %v414
    %v1526 = vunpack.c.l.b16 %v415
    %v1527 = vunpack.c.h.b16 %v415
    %v1528 = vunpack.c.l.b16 %v416
    %v1529 = vunpack.c.h.b16 %v416
    %v1530 = vunpack.c.l.b16 %v417
    %v1531 = vunpack.c.l.b16 %v418
    %v1532 = vunpack.c.h.b16 %v418
    %v1533 = vunpack.c.l.b16 %v419
    %v1534 = vunpack.c.h.b16 %v419
    %v1535 = vunpack.c.l.b16 %v420
    %v1536 = vunpack.c.l.b16 %v421
    %v1537 = vunpack.c.h.b16 %v421
    %v1538 = vunpack.c.l.b16 %v422
    %v1539 = vunpack.c.h.b16 %v422
    %v1540 = vunpack.c.l.b16 %v423
    %v1541 = vunpack.c.l.b16 %v424
    %v1542 = vunpack.c.h.b16 %v424
    %v1543 = vunpack.c.l.b16 %v425
    %v1544 = vunpack.c.h.b16 %v425
    %v1545 = vunpack.c.l.b16 %v426
    %v1546 = vunpack.c.l.b16 %v427
    %v1547 = vunpack.c.h.b16 %v427
    %v1548 = vunpack.c.l.b16 %v428
    %v1549 = vunpack.c.h.b16 %v428
    %v1550 = vunpack.c.l.b16 %v429
    %v1551 = vunpack.c.l.b16 %v430
    %v1552 = vunpack.c.h.b16 %v430
    %v1553 = vunpack.c.l.b16 %v431
    %v1554 = vunpack.c.h.b16 %v431
    %v1555 = vunpack.c.l.b16 %v432
    %v1556 = vunpack.c.l.b16 %v433
    %v1557 = vunpack.c.h.b16 %v433
    %v1558 = vunpack.c.l.b16 %v434
    %v1559 = vunpack.c.h.b16 %v434
    %v1560 = vunpack.c.l.b16 %v435
    %v1561 = vunpack.c.l.b16 %v436
    %v1562 = vunpack.c.h.b16 %v436
    %v1563 = vunpack.c.l.b16 %v437
    %v1564 = vunpack.c.h.b16 %v437
    %v1565 = vunpack.c.l.b16 %v438
    %v1566 = vunpack.c.l.b16 %v439
    %v1567 = vunpack.c.h.b16 %v439
    %v1568 = vunpack.c.l.b16 %v440
    %v1569 = vunpack.c.h.b16 %v440
    %v1570 = vunpack.c.l.b16 %v441
    %v1571 = vunpack.c.l.b16 %v442
    %v1572 = vunpack.c.h.b16 %v442
    %v1573 = vunpack.c.l.b16 %v443
    %v1574 = vunpack.c.h.b16 %v443
    %v1575 = vunpack.c.l.b16 %v444
    %v1576 = vunpack.c.l.b16 %v445
    %v1577 = vunpack.c.h.b16 %v445
    %v1578 = vunpack.c.l.b16 %v446
    %v1579 = vunpack.c.h.b16 %v446
    %v1580 = vunpack.c.l.b16 %v447
    %v1581 = vunpack.c.l.b16 %v448
    %v1582 = vunpack.c.h.b16 %v448
    %v1583 = vunpack.c.l.b16 %v449
    %v1584 = vunpack.c.h.b16 %v449
    %v1585 = vunpack.c.l.b16 %v450
    %v1586 = vunpack.c.l.b16 %v451
    %v1587 = vunpack.c.h.b16 %v451
    %v1588 = vunpack.c.l.b16 %v452
    %v1589 = vunpack.c.h.b16 %v452
    %v1590 = vunpack.c.l.b16 %v453
    %v1591 = vunpack.c.l.b16 %v454
    %v1592 = vunpack.c.h.b16 %v454
    %v1593 = vunpack.c.l.b16 %v455
    %v1594 = vunpack.c.h.b16 %v455
    %v1595 = vunpack.c.l.b16 %v456
    %v1596 = vunpack.c.l.b16 %v457
    %v1597 = vunpack.c.h.b16 %v457
    %v1598 = vunpack.c.l.b16 %v458
    %v1599 = vunpack.c.h.b16 %v458
    %v1600 = vunpack.c.l.b16 %v459
    %v1601 = vunpack.c.l.b16 %v460
    %v1602 = vunpack.c.h.b16 %v460
    %v1603 = vunpack.c.l.b16 %v461
    %v1604 = vunpack.c.h.b16 %v461
    %v1605 = vunpack.c.l.b16 %v462
    %v1606 = vunpack.c.l.b16 %v463
    %v1607 = vunpack.c.h.b16 %v463
    %v1608 = vunpack.c.l.b16 %v464
    %v1609 = vunpack.c.h.b16 %v464
    %v1610 = vunpack.c.l.b16 %v465
    %v1611 = vunpack.c.l.b16 %v466
    %v1612 = vunpack.c.h.b16 %v466
    %v1613 = vunpack.c.l.b16 %v467
    %v1614 = vunpack.c.h.b16 %v467
    %v1615 = vunpack.c.l.b16 %v468
    %v1616 = vunpack.c.l.b16 %v469
    %v1617 = vunpack.c.h.b16 %v469
    %v1618 = vunpack.c.l.b16 %v470
    %v1619 = vunpack.c.h.b16 %v470
    %v1620 = vunpack.c.l.b16 %v471
    %v1621 = vunpack.c.l.b16 %v472
    %v1622 = vunpack.c.h.b16 %v472
    %v1623 = vunpack.c.l.b16 %v473
    %v1624 = vunpack.c.h.b16 %v473
    %v1625 = vunpack.c.l.b16 %v474
    %v1626 = vunpack.c.l.b16 %v475
    %v1627 = vunpack.c.h.b16 %v475
    %v1628 = vunpack.c.l.b16 %v476
    %v1629 = vunpack.c.h.b16 %v476
    %v1630 = vunpack.c.l.b16 %v477
    %v1631 = vunpack.c.l.b16 %v478
    %v1632 = vunpack.c.h.b16 %v478
    %v1633 = vunpack.c.l.b16 %v479
    %v1634 = vunpack.c.h.b16 %v479
    %v1635 = vunpack.c.l.b16 %v480
    %v1636 = vunpack.c.l.b16 %v481
    %v1637 = vunpack.c.h.b16 %v481
    %v1638 = vunpack.c.l.b16 %v482
    %v1639 = vunpack.c.h.b16 %v482
    %v1640 = vunpack.c.l.b16 %v483
    %v1641 = vunpack.c.l.b16 %v484
    %v1642 = vunpack.c.h.b16 %v484
    %v1643 = vunpack.c.l.b16 %v485
    %v1644 = vunpack.c.h.b16 %v485
    %v1645 = vunpack.c.l.b16 %v486
    %v1646 = vunpack.c.l.b16 %v487
    %v1647 = vunpack.c.h.b16 %v487
    %v1648 = vunpack.c.l.b16 %v488
    %v1649 = vunpack.c.h.b16 %v488
    %v1650 = vunpack.c.l.b16 %v489
    %v1651 = vunpack.c.l.b16 %v490
    %v1652 = vunpack.c.h.b16 %v490
    %v1653 = vunpack.c.l.b16 %v491
    %v1654 = vunpack.c.h.b16 %v491
    %v1655 = vunpack.c.l.b16 %v492
    %v1656 = vunpack.c.l.b16 %v493
    %v1657 = vunpack.c.h.b16 %v493
    %v1658 = vunpack.c.l.b16 %v494
    %v1659 = vunpack.c.h.b16 %v494
    %v1660 = vunpack.c.l.b16 %v495
    %v1661 = vunpack.c.l.b16 %v496
    %v1662 = vunpack.c.h.b16 %v496
    %v1663 = vunpack.c.l.b16 %v497
    %v1664 = vunpack.c.h.b16 %v497
    %v1665 = vunpack.c.l.b16 %v498
    %v1666 = vunpack.c.l.b16 %v499
    %v1667 = vunpack.c.h.b16 %v499
    %v1668 = vunpack.c.l.b16 %v500
    %v1669 = vunpack.c.h.b16 %v500
    %v1670 = vunpack.c.l.b16 %v501
    %v1671 = vunpack.c.l.b16 %v502
    %v1672 = vunpack.c.h.b16 %v502
    %v1673 = vunpack.c.l.b16 %v503
    %v1674 = vunpack.c.h.b16 %v503
    %v1675 = vunpack.c.l.b16 %v504
    %v1676 = vunpack.c.l.b16 %v505
    %v1677 = vunpack.c.h.b16 %v505
    %v1678 = vunpack.c.l.b16 %v506
    %v1679 = vunpack.c.h.b16 %v506
    %v1680 = vunpack.c.l.b16 %v507
    %v1681 = vunpack.c.l.b16 %v508
    %v1682 = vunpack.c.h.b16 %v508
    %v1683 = vunpack.c.l.b16 %v509
    %v1684 = vunpack.c.h.b16 %v509
    %v1685 = vunpack.c.l.b16 %v510
    %v1686 = vunpack.c.l.b16 %v511
    %v1687 = vunpack.c.h.b16 %v511
    %v1688 = vunpack.c.l.b16 %v512
    %v1689 = vunpack.c.h.b16 %v512
    %v1690 = vunpack.c.l.b16 %v513
    %v1691 = vunpack.c.l.b16 %v514
    %v1692 = vunpack.c.h.b16 %v514
    %v1693 = vunpack.c.l.b16 %v515
    %v1694 = vunpack.c.h.b16 %v515
    %v1695 = vunpack.c.l.b16 %v516
    %v1696 = vunpack.c.l.b16 %v517
    %v1697 = vunpack.c.h.b16 %v517
    %v1698 = vunpack.c.l.b16 %v518
    %v1699 = vunpack.c.h.b16 %v518
    %v1700 = vunpack.c.l.b16 %v519
    %v1701 = vunpack.c.l.b16 %v520
    %v1702 = vunpack.c.h.b16 %v520
    %v1703 = vunpack.c.l.b16 %v521
    %v1704 = vunpack.c.h.b16 %v521
    %v1705 = vunpack.c.l.b16 %v522
    %v1706 = vunpack.c.l.b16 %v523
    %v1707 = vunpack.c.h.b16 %v523
    %v1708 = vunpack.c.l.b16 %v524
    %v1709 = vunpack.c.h.b16 %v524
    %v1710 = vunpack.c.l.b16 %v525
    %v1711 = vunpack.c.l.b16 %v526
    %v1712 = vunpack.c.h.b16 %v526
    %v1713 = vunpack.c.l.b16 %v527
    %v1714 = vunpack.c.h.b16 %v527
    %v1715 = vunpack.c.l.b16 %v528
    %v1716 = vunpack.c.l.b16 %v529
    %v1717 = vunpack.c.h.b16 %v529
    %v1718 = vunpack.c.l.b16 %v530
    %v1719 = vunpack.c.h.b16 %v530
    %v1720 = vunpack.c.l.b16 %v531
    %v1721 = vunpack.c.l.b16 %v532
    %v1722 = vunpack.c.h.b16 %v532
    %v1723 = vunpack.c.l.b16 %v533
    %v1724 = vunpack.c.h.b16 %v533
    %v1725 = vunpack.c.l.b16 %v534
    %v1726 = vunpack.c.l.b16 %v535
    %v1727 = vunpack.c.h.b16 %v535
    %v1728 = vunpack.c.l.b16 %v536
    %v1729 = vunpack.c.h.b16 %v536
    %v1730 = vunpack.c.l.b16 %v537
    %v1731 = vunpack.c.l.b16 %v538
    %v1732 = vunpack.c.h.b16 %v538
    %v1733 = vunpack.c.l.b16 %v539
    %v1734 = vunpack.c.h.b16 %v539
    %v1735 = vunpack.c.l.b16 %v540
    %v1736 = vunpack.c.l.b16 %v541
    %v1737 = vunpack.c.h.b16 %v541
    %v1738 = vunpack.c.l.b16 %v542
    %v1739 = vunpack.c.h.b16 %v542
    %v1740 = vunpack.c.l.b16 %v543
    %v1741 = vunpack.c.l.b16 %v544
    %v1742 = vunpack.c.h.b16 %v544
    %v1743 = vunpack.c.l.b16 %v545
    %v1744 = vunpack.c.h.b16 %v545
    %v1745 = vunpack.c.l.b16 %v546
    %v1746 = vunpack.c.l.b16 %v547
    %v1747 = vunpack.c.h.b16 %v547
    %v1748 = vunpack.c.l.b16 %v548
    %v1749 = vunpack.c.h.b16 %v548
    %v1750 = vunpack.c.l.b16 %v549
    %v1751 = vunpack.c.l.b16 %v550
    %v1752 = vunpack.c.h.b16 %v550
    %v1753 = vunpack.c.l.b16 %v551
    %v1754 = vunpack.c.h.b16 %v551
    %v1755 = vunpack.c.l.b16 %v552
    %v1756 = vunpack.c.l.b16 %v553
    %v1757 = vunpack.c.h.b16 %v553
    %v1758 = vunpack.c.l.b16 %v554
    %v1759 = vunpack.c.h.b16 %v554
    %v1760 = vunpack.c.l.b16 %v555
    %v1761 = vunpack.c.l.b16 %v556
    %v1762 = vunpack.c.h.b16 %v556
    %v1763 = vunpack.c.l.b16 %v557
    %v1764 = vunpack.c.h.b16 %v557
    %v1765 = vunpack.c.l.b16 %v558
    %v1766 = vunpack.c.l.b16 %v559
    %v1767 = vunpack.c.h.b16 %v559
    %v1768 = vunpack.c.l.b16 %v560
    %v1769 = vunpack.c.h.b16 %v560
    %v1770 = vunpack.c.l.b16 %v561
    %v1771 = vunpack.c.l.b16 %v562
    %v1772 = vunpack.c.h.b16 %v562
    %v1773 = vunpack.c.l.b16 %v563
    %v1774 = vunpack.c.h.b16 %v563
    %v1775 = vunpack.c.l.b16 %v564
    %v1776 = vunpack.c.l.b16 %v565
    %v1777 = vunpack.c.h.b16 %v565
    %v1778 = vunpack.c.l.b16 %v566
    %v1779 = vunpack.c.h.b16 %v566
    %v1780 = vunpack.c.l.b16 %v567
    %v1781 = vunpack.c.l.b16 %v568
    %v1782 = vunpack.c.h.b16 %v568
    %v1783 = vunpack.c.l.b16 %v569
    %v1784 = vunpack.c.h.b16 %v569
    %v1785 = vunpack.c.l.b16 %v570
    %v1786 = vunpack.c.l.b16 %v571
    %v1787 = vunpack.c.h.b16 %v571
    %v1788 = vunpack.c.l.b16 %v572
    %v1789 = vunpack.c.h.b16 %v572
    %v1790 = vunpack.c.l.b16 %v573
    %v1791 = vunpack.c.l.b16 %v574
    %v1792 = vunpack.c.h.b16 %v574
    %v1793 = vunpack.c.l.b16 %v575
    %v1794 = vunpack.c.h.b16 %v575
    %v1795 = vunpack.c.l.b16 %v576
    %v1796 = vunpack.c.l.b16 %v577
    %v1797 = vunpack.c.h.b16 %v577
    %v1798 = vunpack.c.l.b16 %v578
    %v1799 = vunpack.c.h.b16 %v578
    %v1800 = vunpack.c.l.b16 %v579
    %v1801 = vunpack.c.l.b16 %v580
    %v1802 = vunpack.c.h.b16 %v580
    %v1803 = vunpack.c.l.b16 %v581
    %v1804 = vunpack.c.h.b16 %v581
    %v1805 = vunpack.c.l.b16 %v582
    %v1806 = vunpack.c.l.b16 %v583
    %v1807 = vunpack.c.h.b16 %v583
    %v1808 = vunpack.c.l.b16 %v584
    %v1809 = vunpack.c.h.b16 %v584
    %v1810 = vunpack.c.l.b16 %v585
    %v1811 = vunpack.c.l.b16 %v586
    %v1812 = vunpack.c.h.b16 %v586
    %v1813 = vunpack.c.l.b16 %v587
    %v1814 = vunpack.c.h.b16 %v587
    %v1815 = vunpack.c.l.b16 %v588
    %v1816 = vunpack.c.l.b16 %v589
    %v1817 = vunpack.c.h.b16 %v589
    %v1818 = vunpack.c.l.b16 %v590
    %v1819 = vunpack.c.h.b16 %v590
    %v1820 = vunpack.c.l.b16 %v591
    %v1821 = vunpack.c.l.b16 %v592
    %v1822 = vunpack.c.h.b16 %v592
    %v1823 = vunpack.c.l.b16 %v593
    %v1824 = vunpack.c.h.b16 %v593
    %v1825 = vunpack.c.l.b16 %v594
    %v1826 = vunpack.c.l.b16 %v595
    %v1827 = vunpack.c.h.b16 %v595
    %v1828 = vunpack.c.l.b16 %v596
    %v1829 = vunpack.c.h.b16 %v596
    %v1830 = vunpack.c.l.b16 %v597
    %v1831 = vunpack.c.l.b16 %v598
    %v1832 = vunpack.c.h.b16 %v598
    %v1833 = vunpack.c.l.b16 %v599
    %v1834 = vunpack.c.h.b16 %v599
    %v1835 = vunpack.c.l.b16 %v600
    %v1836 = vunpack.c.l.b16 %v601
    %v1837 = vunpack.c.h.b16 %v601
    %v1838 = vunpack.c.l.b16 %v602
    %v1839 = vunpack.c.h.b16 %v602
    %v1840 = vunpack.c.l.b16 %v603
    %v1841 = vunpack.c.l.b16 %v604
    %v1842 = vunpack.c.h.b16 %v604
    %v1843 = vunpack.c.l.b16 %v605
    %v1844 = vunpack.c.h.b16 %v605
    %v1845 = vunpack.c.l.b16 %v606
    %v1846 = vunpack.c.l.b16 %v607
    %v1847 = vunpack.c.h.b16 %v607
    %v1848 = vunpack.c.l.b16 %v608
    %v1849 = vunpack.c.h.b16 %v608
    %v1850 = vunpack.c.l.b16 %v609
    %v1851 = vunpack.c.l.b16 %v610
    %v1852 = vunpack.c.h.b16 %v610
    %v1853 = vunpack.c.l.b16 %v611
    %v1854 = vunpack.c.h.b16 %v611
    %v1855 = vunpack.c.l.b16 %v612
    %v1856 = vunpack.c.l.b16 %v613
    %v1857 = vunpack.c.h.b16 %v613
    %v1858 = vunpack.c.l.b16 %v614
    %v1859 = vunpack.c.h.b16 %v614
    %v1860 = vunpack.c.l.b16 %v615
    %v1861 = vunpack.c.l.b16 %v616
    %v1862 = vunpack.c.h.b16 %v616
    %v1863 = vunpack.c.l.b16 %v617
    %v1864 = vunpack.c.h.b16 %v617
    %v1865 = vunpack.c.l.b16 %v618
    %v1866 = vunpack.c.l.b16 %v619
    %v1867 = vunpack.c.h.b16 %v619
    %v1868 = vunpack.c.l.b16 %v620
    %v1869 = vunpack.c.h.b16 %v620
    %v1870 = vunpack.c.l.b16 %v621
    %v1871 = vunpack.c.l.b16 %v622
    %v1872 = vunpack.c.h.b16 %v622
    %v1873 = vunpack.c.l.b16 %v623
    %v1874 = vunpack.c.h.b16 %v623
    %v1875 = vunpack.c.l.b16 %v624
    %v1876 = vunpack.c.l.b16 %v625
    %v1877 = vunpack.c.h.b16 %v625
    %v1878 = vunpack.c.l.b16 %v626
    %v1879 = vunpack.c.h.b16 %v626
    %v1880 = vunpack.c.l.b16 %v627
    %v1881 = vunpack.c.l.b16 %v628
    %v1882 = vunpack.c.h.b16 %v628
    %v1883 = vunpack.c.l.b16 %v629
    %v1884 = vunpack.c.h.b16 %v629
    %v1885 = vunpack.c.l.b16 %v630
    %v1886 = vunpack.c.l.b16 %v631
    %v1887 = vunpack.c.h.b16 %v631
    %v1888 = vunpack.c.l.b16 %v632
    %v1889 = vunpack.c.h.b16 %v632
    %v1890 = vunpack.c.l.b16 %v633
    %v1891 = vunpack.c.l.b16 %v634
    %v1892 = vunpack.c.h.b16 %v634
    %v1893 = vunpack.c.l.b16 %v635
    %v1894 = vunpack.c.h.b16 %v635
    %v1895 = vunpack.c.l.b16 %v636
    %v1896 = vunpack.c.l.b16 %v637
    %v1897 = vunpack.c.h.b16 %v637
    %v1898 = vunpack.c.l.b16 %v638
    %v1899 = vunpack.c.h.b16 %v638
    %v1900 = vunpack.c.l.b16 %v639
    %v1901 = vunpack.c.l.b16 %v640
    %v1902 = vunpack.c.h.b16 %v640
    %v1903 = vunpack.c.l.b16 %v641
    %v1904 = vunpack.c.h.b16 %v641
    %v1905 = vunpack.c.l.b16 %v642
    %v1906 = vunpack.c.l.b16 %v643
    %v1907 = vunpack.c.h.b16 %v643
    %v1908 = vunpack.c.l.b16 %v644
    %v1909 = vunpack.c.h.b16 %v644
    %v1910 = vunpack.c.l.b16 %v645
    %v1911 = vunpack.c.l.b16 %v646
    %v1912 = vunpack.c.h.b16 %v646
    %v1913 = vunpack.c.l.b16 %v647
    %v1914 = vunpack.c.h.b16 %v647
    %v1915 = vunpack.c.l.b16 %v648
    %v1916 = vunpack.c.l.b16 %v649
    %v1917 = vunpack.c.h.b16 %v649
    %v1918 = vunpack.c.l.b16 %v650
    %v1919 = vunpack.c.h.b16 %v650
    %v1920 = vunpack.c.l.b16 %v651
    %v1921 = vunpack.c.l.b16 %v652
    %v1922 = vunpack.c.h.b16 %v652
    %v1923 = vunpack.c.l.b16 %v653
    %v1924 = vunpack.c.h.b16 %v653
    %v1925 = vunpack.c.l.b16 %v654
    %v1926 = vunpack.c.l.b16 %v655
    %v1927 = vunpack.c.h.b16 %v655
    %v1928 = vunpack.c.l.b16 %v656
    %v1929 = vunpack.c.h.b16 %v656
    %v1930 = vunpack.c.l.b16 %v657
    %v1931 = vunpack.c.l.b16 %v658
    %v1932 = vunpack.c.h.b16 %v658
    %v1933 = vunpack.c.l.b16 %v659
    %v1934 = vunpack.c.h.b16 %v659
    %v1935 = vunpack.c.l.b16 %v660
    %v1936 = vunpack.c.l.b16 %v661
    %v1937 = vunpack.c.h.b16 %v661
    %v1938 = vunpack.c.l.b16 %v662
    %v1939 = vunpack.c.h.b16 %v662
    %v1940 = vunpack.c.l.b16 %v663
    %v1941 = vunpack.c.l.b16 %v664
    %v1942 = vunpack.c.h.b16 %v664
    %v1943 = vunpack.c.l.b16 %v665
    %v1944 = vunpack.c.h.b16 %v665
    %v1945 = vunpack.c.l.b16 %v666
    %v1946 = vunpack.c.l.b16 %v667
    %v1947 = vunpack.c.h.b16 %v667
    %v1948 = vunpack.c.l.b16 %v668
    %v1949 = vunpack.c.h.b16 %v668
    %v1950 = vunpack.c.l.b16 %v669
    %v1951 = vunpack.c.l.b16 %v670
    %v1952 = vunpack.c.h.b16 %v670
    %v1953 = vunpack.c.l.b16 %v671
    %v1954 = vunpack.c.h.b16 %v671
    %v1955 = vunpack.c.l.b16 %v672
    %v1956 = vunpack.c.l.b16 %v673
    %v1957 = vunpack.c.h.b16 %v673
    %v1958 = vunpack.c.l.b16 %v674
    %v1959 = vunpack.c.h.b16 %v674
    %v1960 = vunpack.c.l.b16 %v675
    %v1961 = vunpack.c.l.b16 %v676
    %v1962 = vunpack.c.h.b16 %v676
    %v1963 = vunpack.c.l.b16 %v677
    %v1964 = vunpack.c.h.b16 %v677
    %v1965 = vunpack.c.l.b16 %v678
    %v1966 = vunpack.c.l.b16 %v679
    %v1967 = vunpack.c.h.b16 %v679
    %v1968 = vunpack.c.l.b16 %v680
    %v1969 = vunpack.c.h.b16 %v680
    %v1970 = vunpack.c.l.b16 %v681
    %v1971 = vunpack.c.l.b16 %v682
    %v1972 = vunpack.c.h.b16 %v682
    %v1973 = vunpack.c.l.b16 %v683
    %v1974 = vunpack.c.h.b16 %v683
    %v1975 = vunpack.c.l.b16 %v684
    %v1976 = vunpack.c.l.b16 %v685
    %v1977 = vunpack.c.h.b16 %v685
    %v1978 = vunpack.c.l.b16 %v686
    %v1979 = vunpack.c.h.b16 %v686
    %v1980 = vunpack.c.l.b16 %v687
    %v1981 = vunpack.c.l.b16 %v688
    %v1982 = vunpack.c.h.b16 %v688
    %v1983 = vunpack.c.l.b16 %v689
    %v1984 = vunpack.c.h.b16 %v689
    %v1985 = vunpack.c.l.b16 %v690
    %v1986 = vunpack.c.l.b16 %v691
    %v1987 = vunpack.c.h.b16 %v691
    %v1988 = vunpack.c.l.b16 %v692
    %v1989 = vunpack.c.h.b16 %v692
    %v1990 = vunpack.c.l.b16 %v693
    %v1991 = vunpack.c.l.b16 %v694
    %v1992 = vunpack.c.h.b16 %v694
    %v1993 = vunpack.c.l.b16 %v695
    %v1994 = vunpack.c.h.b16 %v695
    %v1995 = vunpack.c.l.b16 %v696
    %v1996 = vunpack.c.l.b16 %v697
    %v1997 = vunpack.c.h.b16 %v697
    %v1998 = vunpack.c.l.b16 %v698
    %v1999 = vunpack.c.h.b16 %v698
    %v2000 = vunpack.c.l.b16 %v699
    %v2001 = vunpack.c.l.b16 %v700
    %v2002 = vunpack.c.h.b16 %v700
    %v2003 = vunpack.c.l.b16 %v701
    %v2004 = vunpack.c.h.b16 %v701
    %v2005 = vunpack.c.l.b16 %v702
    %v2006 = vunpack.c.l.b16 %v703
    %v2007 = vunpack.c.h.b16 %v703
    %v2008 = vunpack.c.l.b16 %v704
    %v2009 = vunpack.c.h.b16 %v704
    %v2010 = vunpack.c.l.b16 %v705
    %v2011 = vunpack.c.l.b16 %v706
    %v2012 = vunpack.c.h.b16 %v706
    %v2013 = vunpack.c.l.b16 %v707
    %v2014 = vunpack.c.h.b16 %v707
    %v2015 = vunpack.c.l.b16 %v708
    %v2016 = vunpack.c.l.b16 %v709
    %v2017 = vunpack.c.h.b16 %v709
    %v2018 = vunpack.c.l.b16 %v710
    %v2019 = vunpack.c.h.b16 %v710
    %v2020 = vunpack.c.l.b16 %v711
    %v2021 = vunpack.c.l.b16 %v712
    %v2022 = vunpack.c.h.b16 %v712
    %v2023 = vunpack.c.l.b16 %v713
    %v2024 = vunpack.c.h.b16 %v713
    %v2025 = vunpack.c.l.b16 %v714
    %v2026 = vunpack.c.l.b16 %v715
    %v2027 = vunpack.c.h.b16 %v715
    %v2028 = vunpack.c.l.b16 %v716
    %v2029 = vunpack.c.h.b16 %v716
    %v2030 = vunpack.c.l.b16 %v717
    %v2031 = vunpack.c.l.b16 %v718
    %v2032 = vunpack.c.h.b16 %v718
    %v2033 = vunpack.c.l.b16 %v719
    %v2034 = vunpack.c.h.b16 %v719
    %v2035 = vunpack.c.l.b16 %v720
    %v2036 = vunpack.c.l.b16 %v721
    %v2037 = vunpack.c.h.b16 %v721
    %v2038 = vunpack.c.l.b16 %v722
    %v2039 = vunpack.c.h.b16 %v722
    %v2040 = vunpack.c.l.b16 %v723
    %v2041 = vunpack.c.l.b16 %v724
    %v2042 = vunpack.c.h.b16 %v724
    %v2043 = vunpack.c.l.b16 %v725
    %v2044 = vunpack.c.h.b16 %v725
    %v2045 = vunpack.c.l.b16 %v726
    %v2046 = vunpack.c.l.b16 %v727
    %v2047 = vunpack.c.h.b16 %v727
    %v2048 = vunpack.c.l.b16 %v728
    %v2049 = vunpack.c.h.b16 %v728
    %v2050 = vunpack.c.l.b16 %v729
    %v2051 = vunpack.c.l.b16 %v730
    %v2052 = vunpack.c.h.b16 %v730
    %v2053 = vunpack.c.l.b16 %v731
    %v2054 = vunpack.c.h.b16 %v731
    %v2055 = vunpack.c.l.b16 %v732
    %v2056 = vunpack.c.l.b16 %v733
    %v2057 = vunpack.c.h.b16 %v733
    %v2058 = vunpack.c.l.b16 %v734
    %v2059 = vunpack.c.h.b16 %v734
    %v2060 = vunpack.c.l.b16 %v735
    %v2061 = vunpack.c.l.b16 %v736
    %v2062 = vunpack.c.h.b16 %v736
    %v2063 = vunpack.c.l.b16 %v737
    %v2064 = vunpack.c.h.b16 %v737
    %v2065 = vunpack.c.l.b16 %v738
    %v2066 = vunpack.c.l.b16 %v739
    %v2067 = vunpack.c.h.b16 %v739
    %v2068 = vunpack.c.l.b16 %v740
    %v2069 = vunpack.c.h.b16 %v740
    %v2070 = vunpack.c.l.b16 %v741
    %v2071 = vunpack.c.l.b16 %v742
    %v2072 = vunpack.c.h.b16 %v742
    %v2073 = vunpack.c.l.b16 %v743
    %v2074 = vunpack.c.h.b16 %v743
    %v2075 = vunpack.c.l.b16 %v744
    %v2076 = vunpack.c.l.b16 %v745
    %v2077 = vunpack.c.h.b16 %v745
    %v2078 = vunpack.c.l.b16 %v746
    %v2079 = vunpack.c.h.b16 %v746
    %v2080 = vunpack.c.l.b16 %v747
    %v2081 = vunpack.c.l.b16 %v748
    %v2082 = vunpack.c.h.b16 %v748
    %v2083 = vunpack.c.l.b16 %v749
    %v2084 = vunpack.c.h.b16 %v749
    %v2085 = vunpack.c.l.b16 %v750
    %v2086 = vunpack.c.l.b16 %v751
    %v2087 = vunpack.c.h.b16 %v751
    %v2088 = vunpack.c.l.b16 %v752
    %v2089 = vunpack.c.h.b16 %v752
    %v2090 = vunpack.c.l.b16 %v753
    %v2091 = vunpack.c.l.b16 %v754
    %v2092 = vunpack.c.h.b16 %v754
    %v2093 = vunpack.c.l.b16 %v755
    %v2094 = vunpack.c.h.b16 %v755
    %v2095 = vunpack.c.l.b16 %v756
    %v2096 = vunpack.c.l.b16 %v757
    %v2097 = vunpack.c.h.b16 %v757
    %v2098 = vunpack.c.l.b16 %v758
    %v2099 = vunpack.c.h.b16 %v758
    %v2100 = vunpack.c.l.b16 %v759
    %v2101 = vunpack.c.l.b16 %v760
    %v2102 = vunpack.c.h.b16 %v760
    %v2103 = vunpack.c.l.b16 %v761
    %v2104 = vunpack.c.h.b16 %v761
    %v2105 = vunpack.c.l.b16 %v762
    %v2106 = vunpack.c.l.b16 %v763
    %v2107 = vunpack.c.h.b16 %v763
    %v2108 = vunpack.c.l.b16 %v764
    %v2109 = vunpack.c.h.b16 %v764
    %v2110 = vunpack.c.l.b16 %v765
    %v2111 = vunpack.c.l.b16 %v766
    %v2112 = vunpack.c.h.b16 %v766
    %v2113 = vunpack.c.l.b16 %v767
    %v2114 = vunpack.c.h.b16 %v767
    %v2115 = vunpack.c.l.b16 %v768
    %v2116 = vunpack.c.l.b16 %v769
    %v2117 = vunpack.c.h.b16 %v769
    %v2118 = vunpack.c.l.b16 %v770
    %v2119 = vunpack.c.h.b16 %v770
    %v2120 = vunpack.c.l.b16 %v771
    %v2121 = vunpack.c.l.b16 %v772
    %v2122 = vunpack.c.h.b16 %v772
    %v2123 = vunpack.c.l.b16 %v773
    %v2124 = vunpack.c.h.b16 %v773
    %v2125 = vunpack.c.l.b16 %v774
    %v2126 = vpack.c.b16 %v1331, %v1326
    %v2127 = vpack.c.b16 %v1332, %v1327
    %v2128 = vpack.c.b16 %v1333, %v1328
    %v2129 = vpack.c.b16 %v1334, %v1329
    %v2130 = vpack.c.b16 %v1335, %v1330
    %v2131 = vpack.c.b16 %v1341, %v1336
    %v2132 = vpack.c.b16 %v1342, %v1337
    %v2133 = vpack.c.b16 %v1343, %v1338
    %v2134 = vpack.c.b16 %v1344, %v1339
    %v2135 = vpack.c.b16 %v1345, %v1340
    %v2136 = vpack.c.b16 %v1351, %v1346
    %v2137 = vpack.c.b16 %v1352, %v1347
    %v2138 = vpack.c.b16 %v1353, %v1348
    %v2139 = vpack.c.b16 %v1354, %v1349
    %v2140 = vpack.c.b16 %v1355, %v1350
    %v2141 = vpack.c.b16 %v1361, %v1356
    %v2142 = vpack.c.b16 %v1362, %v1357
    %v2143 = vpack.c.b16 %v1363, %v1358
    %v2144 = vpack.c.b16 %v1364, %v1359
    %v2145 = vpack.c.b16 %v1365, %v1360
    %v2146 = vpack.c.b16 %v1371, %v1366
    %v2147 = vpack.c.b16 %v1372, %v1367
    %v2148 = vpack.c.b16 %v1373, %v1368
    %v2149 = vpack.c.b16 %v1374, %v1369
    %v2150 = vpack.c.b16 %v1375, %v1370
    %v2151 = vpack.c.b16 %v1381, %v1376
    %v2152 = vpack.c.b16 %v1382, %v1377
    %v2153 = vpack.c.b16 %v1383, %v1378
    %v2154 = vpack.c.b16 %v1384, %v1379
    %v2155 = vpack.c.b16 %v1385, %v1380
    %v2156 = vpack.c.b16 %v1391, %v1386
    %v2157 = vpack.c.b16 %v1392, %v1387
    %v2158 = vpack.c.b16 %v1393, %v1388
    %v2159 = vpack.c.b16 %v1394, %v1389
    %v2160 = vpack.c.b16 %v1395, %v1390
    %v2161 = vpack.c.b16 %v1401, %v1396
    %v2162 = vpack.c.b16 %v1402, %v1397
    %v2163 = vpack.c.b16 %v1403, %v1398
    %v2164 = vpack.c.b16 %v1404, %v1399
    %v2165 = vpack.c.b16 %v1405, %v1400
    %v2166 = vpack.c.b16 %v1411, %v1406
    %v2167 = vpack.c.b16 %v1412, %v1407
    %v2168 = vpack.c.b16 %v1413, %v1408
    %v2169 = vpack.c.b16 %v1414, %v1409
    %v2170 = vpack.c.b16 %v1415, %v1410
    %v2171 = vpack.c.b16 %v1421, %v1416
    %v2172 = vpack.c.b16 %v1422, %v1417
    %v2173 = vpack.c.b16 %v1423, %v1418
    %v2174 = vpack.c.b16 %v1424, %v1419
    %v2175 = vpack.c.b16 %v1425, %v1420
    %v2176 = vpack.c.b16 %v1431, %v1426
    %v2177 = vpack.c.b16 %v1432, %v1427
    %v2178 = vpack.c.b16 %v1433, %v1428
    %v2179 = vpack.c.b16 %v1434, %v1429
    %v2180 = vpack.c.b16 %v1435, %v1430
    %v2181 = vpack.c.b16 %v1441, %v1436
    %v2182 = vpack.c.b16 %v1442, %v1437
    %v2183 = vpack.c.b16 %v1443, %v1438
    %v2184 = vpack.c.b16 %v1444, %v1439
    %v2185 = vpack.c.b16 %v1445, %v1440
    %v2186 = vpack.c.b16 %v1451, %v1446
    %v2187 = vpack.c.b16 %v1452, %v1447
    %v2188 = vpack.c.b16 %v1453, %v1448
    %v2189 = vpack.c.b16 %v1454, %v1449
    %v2190 = vpack.c.b16 %v1455, %v1450
    %v2191 = vpack.c.b16 %v1461, %v1456
    %v2192 = vpack.c.b16 %v1462, %v1457
    %v2193 = vpack.c.b16 %v1463, %v1458
    %v2194 = vpack.c.b16 %v1464, %v1459
    %v2195 = vpack.c.b16 %v1465, %v1460
    %v2196 = vpack.c.b16 %v1471, %v1466
    %v2197 = vpack.c.b16 %v1472, %v1467
    %v2198 = vpack.c.b16 %v1473, %v1468
    %v2199 = vpack.c.b16 %v1474, %v1469
    %v2200 = vpack.c.b16 %v1475, %v1470
    %v2201 = vpack.c.b16 %v1481, %v1476
    %v2202 = vpack.c.b16 %v1482, %v1477
    %v2203 = vpack.c.b16 %v1483, %v1478
    %v2204 = vpack.c.b16 %v1484, %v1479
    %v2205 = vpack.c.b16 %v1485, %v1480
    %v2206 = vpack.c.b16 %v1491, %v1486
    %v2207 = vpack.c.b16 %v1492, %v1487
    %v2208 = vpack.c.b16 %v1493, %v1488
    %v2209 = vpack.c.b16 %v1494, %v1489
    %v2210 = vpack.c.b16 %v1495, %v1490
    %v2211 = vpack.c.b16 %v1501, %v1496
    %v2212 = vpack.c.b16 %v1502, %v1497
    %v2213 = vpack.c.b16 %v1503, %v1498
    %v2214 = vpack.c.b16 %v1504, %v1499
    %v2215 = vpack.c.b16 %v1505, %v1500
    %v2216 = vpack.c.b16 %v1511, %v1506
    %v2217 = vpack.c.b16 %v1512, %v1507
    %v2218 = vpack.c.b16 %v1513, %v1508
    %v2219 = vpack.c.b16 %v1514, %v1509
    %v2220 = vpack.c.b16 %v1515, %v1510
    %v2221 = vpack.c.b16 %v1521, %v1516
    %v2222 = vpack.c.b16 %v1522, %v1517
    %v2223 = vpack.c.b16 %v1523, %v1518
    %v2224 = vpack.c.b16 %v1524, %v1519
    %v2225 = vpack.c.b16 %v1525, %v1520
    %v2226 = vpack.c.b16 %v1531, %v1526
    %v2227 = vpack.c.b16 %v1532, %v1527
    %v2228 = vpack.c.b16 %v1533, %v1528
    %v2229 = vpack.c.b16 %v1534, %v1529
    %v2230 = vpack.c.b16 %v1535, %v1530
    %v2231 = vpack.c.b16 %v1541, %v1536
    %v2232 = vpack.c.b16 %v1542, %v1537
    %v2233 = vpack.c.b16 %v1543, %v1538
    %v2234 = vpack.c.b16 %v1544, %v1539
    %v2235 = vpack.c.b16 %v1545, %v1540
    %v2236 = vpack.c.b16 %v1551, %v1546
    %v2237 = vpack.c.b16 %v1552, %v1547
    %v2238 = vpack.c.b16 %v1553, %v1548
    %v2239 = vpack.c.b16 %v1554, %v1549
    %v2240 = vpack.c.b16 %v1555, %v1550
    %v2241 = vpack.c.b16 %v1561, %v1556
    %v2242 = vpack.c.b16 %v1562, %v1557
    %v2243 = vpack.c.b16 %v1563, %v1558
    %v2244 = vpack.c.b16 %v1564, %v1559
    %v2245 = vpack.c.b16 %v1565, %v1560
    %v2246 = vpack.c.b16 %v1571, %v1566
    %v2247 = vpack.c.b16 %v1572, %v1567
    %v2248 = vpack.c.b16 %v1573, %v1568
    %v2249 = vpack.c.b16 %v1574, %v1569
    %v2250 = vpack.c.b16 %v1575, %v1570
    %v2251 = vpack.c.b16 %v1581, %v1576
    %v2252 = vpack.c.b16 %v1582, %v1577
    %v2253 = vpack.c.b16 %v1583, %v1578
    %v2254 = vpack.c.b16 %v1584, %v1579
    %v2255 = vpack.c.b16 %v1585, %v1580
    %v2256 = vpack.c.b16 %v1591, %v1586
    %v2257 = vpack.c.b16 %v1592, %v1587
    %v2258 = vpack.c.b16 %v1593, %v1588
    %v2259 = vpack.c.b16 %v1594, %v1589
    %v2260 = vpack.c.b16 %v1595, %v1590
    %v2261 = vpack.c.b16 %v1601, %v1596
    %v2262 = vpack.c.b16 %v1602, %v1597
    %v2263 = vpack.c.b16 %v1603, %v1598
    %v2264 = vpack.c.b16 %v1604, %v1599
    %v2265 = vpack.c.b16 %v1605, %v1600
    %v2266 = vpack.c.b16 %v1611, %v1606
    %v2267 = vpack.c.b16 %v1612, %v1607
    %v2268 = vpack.c.b16 %v1613, %v1608
    %v2269 = vpack.c.b16 %v1614, %v1609
    %v2270 = vpack.c.b16 %v1615, %v1610
    %v2271 = vpack.c.b16 %v1621, %v1616
    %v2272 = vpack.c.b16 %v1622, %v1617
    %v2273 = vpack.c.b16 %v1623, %v1618
    %v2274 = vpack.c.b16 %v1624, %v1619
    %v2275 = vpack.c.b16 %v1625, %v1620
    %v2276 = vpack.c.b16 %v1631, %v1626
    %v2277 = vpack.c.b16 %v1632, %v1627
    %v2278 = vpack.c.b16 %v1633, %v1628
    %v2279 = vpack.c.b16 %v1634, %v1629
    %v2280 = vpack.c.b16 %v1635, %v1630
    %v2281 = vpack.c.b16 %v1641, %v1636
    %v2282 = vpack.c.b16 %v1642, %v1637
    %v2283 = vpack.c.b16 %v1643, %v1638
    %v2284 = vpack.c.b16 %v1644, %v1639
    %v2285 = vpack.c.b16 %v1645, %v1640
    %v2286 = vpack.c.b16 %v1651, %v1646
    %v2287 = vpack.c.b16 %v1652, %v1647
    %v2288 = vpack.c.b16 %v1653, %v1648
    %v2289 = vpack.c.b16 %v1654, %v1649
    %v2290 = vpack.c.b16 %v1655, %v1650
    %v2291 = vpack.c.b16 %v1661, %v1656
    %v2292 = vpack.c.b16 %v1662, %v1657
    %v2293 = vpack.c.b16 %v1663, %v1658
    %v2294 = vpack.c.b16 %v1664, %v1659
    %v2295 = vpack.c.b16 %v1665, %v1660
    %v2296 = vpack.c.b16 %v1671, %v1666
    %v2297 = vpack.c.b16 %v1672, %v1667
    %v2298 = vpack.c.b16 %v1673, %v1668
    %v2299 = vpack.c.b16 %v1674, %v1669
    %v2300 = vpack.c.b16 %v1675, %v1670
    %v2301 = vpack.c.b16 %v1681, %v1676
    %v2302 = vpack.c.b16 %v1682, %v1677
    %v2303 = vpack.c.b16 %v1683, %v1678
    %v2304 = vpack.c.b16 %v1684, %v1679
    %v2305 = vpack.c.b16 %v1685, %v1680
    %v2306 = vpack.c.b16 %v1691, %v1686
    %v2307 = vpack.c.b16 %v1692, %v1687
    %v2308 = vpack.c.b16 %v1693, %v1688
    %v2309 = vpack.c.b16 %v1694, %v1689
    %v2310 = vpack.c.b16 %v1695, %v1690
    %v2311 = vpack.c.b16 %v1701, %v1696
    %v2312 = vpack.c.b16 %v1702, %v1697
    %v2313 = vpack.c.b16 %v1703, %v1698
    %v2314 = vpack.c.b16 %v1704, %v1699
    %v2315 = vpack.c.b16 %v1705, %v1700
    %v2316 = vpack.c.b16 %v1711, %v1706
    %v2317 = vpack.c.b16 %v1712, %v1707
    %v2318 = vpack.c.b16 %v1713, %v1708
    %v2319 = vpack.c.b16 %v1714, %v1709
    %v2320 = vpack.c.b16 %v1715, %v1710
    %v2321 = vpack.c.b16 %v1721, %v1716
    %v2322 = vpack.c.b16 %v1722, %v1717
    %v2323 = vpack.c.b16 %v1723, %v1718
    %v2324 = vpack.c.b16 %v1724, %v1719
    %v2325 = vpack.c.b16 %v1725, %v1720
    %v2326 = vpack.c.b16 %v1731, %v1726
    %v2327 = vpack.c.b16 %v1732, %v1727
    %v2328 = vpack.c.b16 %v1733, %v1728
    %v2329 = vpack.c.b16 %v1734, %v1729
    %v2330 = vpack.c.b16 %v1735, %v1730
    %v2331 = vpack.c.b16 %v1741, %v1736
    %v2332 = vpack.c.b16 %v1742, %v1737
    %v2333 = vpack.c.b16 %v1743, %v1738
    %v2334 = vpack.c.b16 %v1744, %v1739
    %v2335 = vpack.c.b16 %v1745, %v1740
    %v2336 = vpack.c.b16 %v1751, %v1746
    %v2337 = vpack.c.b16 %v1752, %v1747
    %v2338 = vpack.c.b16 %v1753, %v1748
    %v2339 = vpack.c.b16 %v1754, %v1749
    %v2340 = vpack.c.b16 %v1755, %v1750
    %v2341 = vpack.c.b16 %v1761, %v1756
    %v2342 = vpack.c.b16 %v1762, %v1757
    %v2343 = vpack.c.b16 %v1763, %v1758
    %v2344 = vpack.c.b16 %v1764, %v1759
    %v2345 = vpack.c.b16 %v1765, %v1760
    %v2346 = vpack.c.b16 %v1771, %v1766
    %v2347 = vpack.c.b16 %v1772, %v1767
    %v2348 = vpack.c.b16 %v1773, %v1768
    %v2349 = vpack.c.b16 %v1774, %v1769
    %v2350 = vpack.c.b16 %v1775, %v1770
    %v2351 = vpack.c.b16 %v1781, %v1776
    %v2352 = vpack.c.b16 %v1782, %v1777
    %v2353 = vpack.c.b16 %v1783, %v1778
    %v2354 = vpack.c.b16 %v1784, %v1779
    %v2355 = vpack.c.b16 %v1785, %v1780
    %v2356 = vpack.c.b16 %v1791, %v1786
    %v2357 = vpack.c.b16 %v1792, %v1787
    %v2358 = vpack.c.b16 %v1793, %v1788
    %v2359 = vpack.c.b16 %v1794, %v1789
    %v2360 = vpack.c.b16 %v1795, %v1790
    %v2361 = vpack.c.b16 %v1801, %v1796
    %v2362 = vpack.c.b16 %v1802, %v1797
    %v2363 = vpack.c.b16 %v1803, %v1798
    %v2364 = vpack.c.b16 %v1804, %v1799
    %v2365 = vpack.c.b16 %v1805, %v1800
    %v2366 = vpack.c.b16 %v1811, %v1806
    %v2367 = vpack.c.b16 %v1812, %v1807
    %v2368 = vpack.c.b16 %v1813, %v1808
    %v2369 = vpack.c.b16 %v1814, %v1809
    %v2370 = vpack.c.b16 %v1815, %v1810
    %v2371 = vpack.c.b16 %v1821, %v1816
    %v2372 = vpack.c.b16 %v1822, %v1817
    %v2373 = vpack.c.b16 %v1823, %v1818
    %v2374 = vpack.c.b16 %v1824, %v1819
    %v2375 = vpack.c.b16 %v1825, %v1820
    %v2376 = vpack.c.b16 %v1831, %v1826
    %v2377 = vpack.c.b16 %v1832, %v1827
    %v2378 = vpack.c.b16 %v1833, %v1828
    %v2379 = vpack.c.b16 %v1834, %v1829
    %v2380 = vpack.c.b16 %v1835, %v1830
    %v2381 = vpack.c.b16 %v1841, %v1836
    %v2382 = vpack.c.b16 %v1842, %v1837
    %v2383 = vpack.c.b16 %v1843, %v1838
    %v2384 = vpack.c.b16 %v1844, %v1839
    %v2385 = vpack.c.b16 %v1845, %v1840
    %v2386 = vpack.c.b16 %v1851, %v1846
    %v2387 = vpack.c.b16 %v1852, %v1847
    %v2388 = vpack.c.b16 %v1853, %v1848
    %v2389 = vpack.c.b16 %v1854, %v1849
    %v2390 = vpack.c.b16 %v1855, %v1850
    %v2391 = vpack.c.b16 %v1861, %v1856
    %v2392 = vpack.c.b16 %v1862, %v1857
    %v2393 = vpack.c.b16 %v1863, %v1858
    %v2394 = vpack.c.b16 %v1864, %v1859
    %v2395 = vpack.c.b16 %v1865, %v1860
    %v2396 = vpack.c.b16 %v1871, %v1866
    %v2397 = vpack.c.b16 %v1872, %v1867
    %v2398 = vpack.c.b16 %v1873, %v1868
    %v2399 = vpack.c.b16 %v1874, %v1869
    %v2400 = vpack.c.b16 %v1875, %v1870
    %v2401 = vpack.c.b16 %v1881, %v1876
    %v2402 = vpack.c.b16 %v1882, %v1877
    %v2403 = vpack.c.b16 %v1883, %v1878
    %v2404 = vpack.c.b16 %v1884, %v1879
    %v2405 = vpack.c.b16 %v1885, %v1880
    %v2406 = vpack.c.b16 %v1891, %v1886
    %v2407 = vpack.c.b16 %v1892, %v1887
    %v2408 = vpack.c.b16 %v1893, %v1888
    %v2409 = vpack.c.b16 %v1894, %v1889
    %v2410 = vpack.c.b16 %v1895, %v1890
    %v2411 = vpack.c.b16 %v1901, %v1896
    %v2412 = vpack.c.b16 %v1902, %v1897
    %v2413 = vpack.c.b16 %v1903, %v1898
    %v2414 = vpack.c.b16 %v1904, %v1899
    %v2415 = vpack.c.b16 %v1905, %v1900
    %v2416 = vpack.c.b16 %v1911, %v1906
    %v2417 = vpack.c.b16 %v1912, %v1907
    %v2418 = vpack.c.b16 %v1913, %v1908
    %v2419 = vpack.c.b16 %v1914, %v1909
    %v2420 = vpack.c.b16 %v1915, %v1910
    %v2421 = vpack.c.b16 %v1921, %v1916
    %v2422 = vpack.c.b16 %v1922, %v1917
    %v2423 = vpack.c.b16 %v1923, %v1918
    %v2424 = vpack.c.b16 %v1924, %v1919
    %v2425 = vpack.c.b16 %v1925, %v1920
    %v2426 = vpack.c.b16 %v1931, %v1926
    %v2427 = vpack.c.b16 %v1932, %v1927
    %v2428 = vpack.c.b16 %v1933, %v1928
    %v2429 = vpack.c.b16 %v1934, %v1929
    %v2430 = vpack.c.b16 %v1935, %v1930
    %v2431 = vpack.c.b16 %v1941, %v1936
    %v2432 = vpack.c.b16 %v1942, %v1937
    %v2433 = vpack.c.b16 %v1943, %v1938
    %v2434 = vpack.c.b16 %v1944, %v1939
    %v2435 = vpack.c.b16 %v1945, %v1940
    %v2436 = vpack.c.b16 %v1951, %v1946
    %v2437 = vpack.c.b16 %v1952, %v1947
    %v2438 = vpack.c.b16 %v1953, %v1948
    %v2439 = vpack.c.b16 %v1954, %v1949
    %v2440 = vpack.c.b16 %v1955, %v1950
    %v2441 = vpack.c.b16 %v1961, %v1956
    %v2442 = vpack.c.b16 %v1962, %v1957
    %v2443 = vpack.c.b16 %v1963, %v1958
    %v2444 = vpack.c.b16 %v1964, %v1959
    %v2445 = vpack.c.b16 %v1965, %v1960
    %v2446 = vpack.c.b16 %v1971, %v1966
    %v2447 = vpack.c.b16 %v1972, %v1967
    %v2448 = vpack.c.b16 %v1973, %v1968
    %v2449 = vpack.c.b16 %v1974, %v1969
    %v2450 = vpack.c.b16 %v1975, %v1970
    %v2451 = vpack.c.b16 %v1981, %v1976
    %v2452 = vpack.c.b16 %v1982, %v1977
    %v2453 = vpack.c.b16 %v1983, %v1978
    %v2454 = vpack.c.b16 %v1984, %v1979
    %v2455 = vpack.c.b16 %v1985, %v1980
    %v2456 = vpack.c.b16 %v1991, %v1986
    %v2457 = vpack.c.b16 %v1992, %v1987
    %v2458 = vpack.c.b16 %v1993, %v1988
    %v2459 = vpack.c.b16 %v1994, %v1989
    %v2460 = vpack.c.b16 %v1995, %v1990
    %v2461 = vpack.c.b16 %v2001, %v1996
    %v2462 = vpack.c.b16 %v2002, %v1997
    %v2463 = vpack.c.b16 %v2003, %v1998
    %v2464 = vpack.c.b16 %v2004, %v1999
    %v2465 = vpack.c.b16 %v2005, %v2000
    %v2466 = vpack.c.b16 %v2011, %v2006
    %v2467 = vpack.c.b16 %v2012, %v2007
    %v2468 = vpack.c.b16 %v2013, %v2008
    %v2469 = vpack.c.b16 %v2014, %v2009
    %v2470 = vpack.c.b16 %v2015, %v2010
    %v2471 = vpack.c.b16 %v2021, %v2016
    %v2472 = vpack.c.b16 %v2022, %v2017
    %v2473 = vpack.c.b16 %v2023, %v2018
    %v2474 = vpack.c.b16 %v2024, %v2019
    %v2475 = vpack.c.b16 %v2025, %v2020
    %v2476 = vpack.c.b16 %v2031, %v2026
    %v2477 = vpack.c.b16 %v2032, %v2027
    %v2478 = vpack.c.b16 %v2033, %v2028
    %v2479 = vpack.c.b16 %v2034, %v2029
    %v2480 = vpack.c.b16 %v2035, %v2030
    %v2481 = vpack.c.b16 %v2041, %v2036
    %v2482 = vpack.c.b16 %v2042, %v2037
    %v2483 = vpack.c.b16 %v2043, %v2038
    %v2484 = vpack.c.b16 %v2044, %v2039
    %v2485 = vpack.c.b16 %v2045, %v2040
    %v2486 = vpack.c.b16 %v2051, %v2046
    %v2487 = vpack.c.b16 %v2052, %v2047
    %v2488 = vpack.c.b16 %v2053, %v2048
    %v2489 = vpack.c.b16 %v2054, %v2049
    %v2490 = vpack.c.b16 %v2055, %v2050
    %v2491 = vpack.c.b16 %v2061, %v2056
    %v2492 = vpack.c.b16 %v2062, %v2057
    %v2493 = vpack.c.b16 %v2063, %v2058
    %v2494 = vpack.c.b16 %v2064, %v2059
    %v2495 = vpack.c.b16 %v2065, %v2060
    %v2496 = vpack.c.b16 %v2071, %v2066
    %v2497 = vpack.c.b16 %v2072, %v2067
    %v2498 = vpack.c.b16 %v2073, %v2068
    %v2499 = vpack.c.b16 %v2074, %v2069
    %v2500 = vpack.c.b16 %v2075, %v2070
    %v2501 = vpack.c.b16 %v2081, %v2076
    %v2502 = vpack.c.b16 %v2082, %v2077
    %v2503 = vpack.c.b16 %v2083, %v2078
    %v2504 = vpack.c.b16 %v2084, %v2079
    %v2505 = vpack.c.b16 %v2085, %v2080
    %v2506 = vpack.c.b16 %v2091, %v2086
    %v2507 = vpack.c.b16 %v2092, %v2087
    %v2508 = vpack.c.b16 %v2093, %v2088
    %v2509 = vpack.c.b16 %v2094, %v2089
    %v2510 = vpack.c.b16 %v2095, %v2090
    %v2511 = vpack.c.b16 %v2101, %v2096
    %v2512 = vpack.c.b16 %v2102, %v2097
    %v2513 = vpack.c.b16 %v2103, %v2098
    %v2514 = vpack.c.b16 %v2104, %v2099
    %v2515 = vpack.c.b16 %v2105, %v2100
    %v2516 = vpack.c.b16 %v2111, %v2106
    %v2517 = vpack.c.b16 %v2112, %v2107
    %v2518 = vpack.c.b16 %v2113, %v2108
    %v2519 = vpack.c.b16 %v2114, %v2109
    %v2520 = vpack.c.b16 %v2115, %v2110
    %v2521 = vpack.c.b16 %v2121, %v2116
    %v2522 = vpack.c.b16 %v2122, %v2117
    %v2523 = vpack.c.b16 %v2123, %v2118
    %v2524 = vpack.c.b16 %v2124, %v2119
    %v2525 = vpack.c.b16 %v2125, %v2120
    %2926 = vmatpush.bf16.msra.mxu0 %v2161
    %2927 = vmatpush.bf16.msra.mxu0 %v2156
    %2928 = vmatpush.bf16.msra.mxu0 %v2151
    %2929 = vmatpush.bf16.msra.mxu0 %v2146
    %2930 = vmatpush.bf16.msra.mxu0 %v2141
    %2931 = vmatpush.bf16.msra.mxu0 %v2136
    %2932 = vmatpush.bf16.msra.mxu0 %v2131
    %2933 = vmatpush.bf16.msra.mxu0 %v2126
    %2934 = vmatmul.bf16.gmra.mxu0 %v826
    %v2935 = vpop.f32.mrf.mxu0
    %v2936 = vadd.f32 0.0, %v2935
    %v2937 = vpop.f32.mrf.mxu0
    %2938 = vdwg.mxu0
    %2939 = vmatpush.bf16.msra.mxu0 %v2201
    %2940 = vmatpush.bf16.msra.mxu0 %v2196
    %2941 = vmatpush.bf16.msra.mxu0 %v2191
    %2942 = vmatpush.bf16.msra.mxu0 %v2186
    %2943 = vmatpush.bf16.msra.mxu0 %v2181
    %2944 = vmatpush.bf16.msra.mxu0 %v2176
    %2945 = vmatpush.bf16.msra.mxu0 %v2171
    %2946 = vmatpush.bf16.msra.mxu0 %v2166
    %2947 = vmatmul.bf16.gmra.mxu0 %v827
    %v2948 = vpop.f32.mrf.mxu0
    %v2949 = vadd.f32 %v2936, %v2948
    %v2950 = vpop.f32.mrf.mxu0
    %2951 = vdwg.mxu0
    %2952 = vmatpush.bf16.msra.mxu0 %v2241
    %2953 = vmatpush.bf16.msra.mxu0 %v2236
    %2954 = vmatpush.bf16.msra.mxu0 %v2231
    %2955 = vmatpush.bf16.msra.mxu0 %v2226
    %2956 = vmatpush.bf16.msra.mxu0 %v2221
    %2957 = vmatpush.bf16.msra.mxu0 %v2216
    %2958 = vmatpush.bf16.msra.mxu0 %v2211
    %2959 = vmatpush.bf16.msra.mxu0 %v2206
    %2960 = vmatmul.bf16.gmra.mxu0 %v828
    %v2961 = vpop.f32.mrf.mxu0
    %v2962 = vadd.f32 %v2949, %v2961
    %v2963 = vpop.f32.mrf.mxu0
    %2964 = vdwg.mxu0
    %2965 = vmatpush.bf16.msra.mxu0 %v2281
    %2966 = vmatpush.bf16.msra.mxu0 %v2276
    %2967 = vmatpush.bf16.msra.mxu0 %v2271
    %2968 = vmatpush.bf16.msra.mxu0 %v2266
    %2969 = vmatpush.bf16.msra.mxu0 %v2261
    %2970 = vmatpush.bf16.msra.mxu0 %v2256
    %2971 = vmatpush.bf16.msra.mxu0 %v2251
    %2972 = vmatpush.bf16.msra.mxu0 %v2246
    %2973 = vmatmul.bf16.gmra.mxu0 %v829
    %v2974 = vpop.f32.mrf.mxu0
    %v2975 = vadd.f32 %v2962, %v2974
    %v2976 = vpop.f32.mrf.mxu0
    %2977 = vdwg.mxu0
    %2978 = vmatpush.bf16.msra.mxu0 %v2321
    %2979 = vmatpush.bf16.msra.mxu0 %v2316
    %2980 = vmatpush.bf16.msra.mxu0 %v2311
    %2981 = vmatpush.bf16.msra.mxu0 %v2306
    %2982 = vmatpush.bf16.msra.mxu0 %v2301
    %2983 = vmatpush.bf16.msra.mxu0 %v2296
    %2984 = vmatpush.bf16.msra.mxu0 %v2291
    %2985 = vmatpush.bf16.msra.mxu0 %v2286
    %2986 = vmatmul.bf16.gmra.mxu0 %v830
    %v2987 = vpop.f32.mrf.mxu0
    %v2988 = vadd.f32 %v2975, %v2987
    %v2989 = vpop.f32.mrf.mxu0
    %2990 = vdwg.mxu0
    %2991 = vmatpush.bf16.msra.mxu0 %v2361
    %2992 = vmatpush.bf16.msra.mxu0 %v2356
    %2993 = vmatpush.bf16.msra.mxu0 %v2351
    %2994 = vmatpush.bf16.msra.mxu0 %v2346
    %2995 = vmatpush.bf16.msra.mxu0 %v2341
    %2996 = vmatpush.bf16.msra.mxu0 %v2336
    %2997 = vmatpush.bf16.msra.mxu0 %v2331
    %2998 = vmatpush.bf16.msra.mxu0 %v2326
    %2999 = vmatmul.bf16.gmra.mxu0 %v831
    %v3000 = vpop.f32.mrf.mxu0
    %v3001 = vadd.f32 %v2988, %v3000
    %v3002 = vpop.f32.mrf.mxu0
    %3003 = vdwg.mxu0
    %3004 = vmatpush.bf16.msra.mxu0 %v2401
    %3005 = vmatpush.bf16.msra.mxu0 %v2396
    %3006 = vmatpush.bf16.msra.mxu0 %v2391
    %3007 = vmatpush.bf16.msra.mxu0 %v2386
    %3008 = vmatpush.bf16.msra.mxu0 %v2381
    %3009 = vmatpush.bf16.msra.mxu0 %v2376
    %3010 = vmatpush.bf16.msra.mxu0 %v2371
    %3011 = vmatpush.bf16.msra.mxu0 %v2366
    %3012 = vmatmul.bf16.gmra.mxu0 %v832
    %v3013 = vpop.f32.mrf.mxu0
    %v3014 = vadd.f32 %v3001, %v3013
    %v3015 = vpop.f32.mrf.mxu0
    %3016 = vdwg.mxu0
    %3017 = vmatpush.bf16.msra.mxu0 %v2441
    %3018 = vmatpush.bf16.msra.mxu0 %v2436
    %3019 = vmatpush.bf16.msra.mxu0 %v2431
    %3020 = vmatpush.bf16.msra.mxu0 %v2426
    %3021 = vmatpush.bf16.msra.mxu0 %v2421
    %3022 = vmatpush.bf16.msra.mxu0 %v2416
    %3023 = vmatpush.bf16.msra.mxu0 %v2411
    %3024 = vmatpush.bf16.msra.mxu0 %v2406
    %3025 = vmatmul.bf16.gmra.mxu0 %v833
    %v3026 = vpop.f32.mrf.mxu0
    %v3027 = vadd.f32 %v3014, %v3026
    %v3028 = vpop.f32.mrf.mxu0
    %3029 = vdwg.mxu0
    %3030 = vmatpush.bf16.msra.mxu0 %v2481
    %3031 = vmatpush.bf16.msra.mxu0 %v2476
    %3032 = vmatpush.bf16.msra.mxu0 %v2471
    %3033 = vmatpush.bf16.msra.mxu0 %v2466
    %3034 = vmatpush.bf16.msra.mxu0 %v2461
    %3035 = vmatpush.bf16.msra.mxu0 %v2456
    %3036 = vmatpush.bf16.msra.mxu0 %v2451
    %3037 = vmatpush.bf16.msra.mxu0 %v2446
    %3038 = vmatmul.bf16.gmra.mxu0 %v834
    %v3039 = vpop.f32.mrf.mxu0
    %v3040 = vadd.f32 %v3027, %v3039
    %v3041 = vpop.f32.mrf.mxu0
    %3042 = vdwg.mxu0
    %3043 = vmatpush.bf16.msra.mxu0 %v2521
    %3044 = vmatpush.bf16.msra.mxu0 %v2516
    %3045 = vmatpush.bf16.msra.mxu0 %v2511
    %3046 = vmatpush.bf16.msra.mxu0 %v2506
    %3047 = vmatpush.bf16.msra.mxu0 %v2501
    %3048 = vmatpush.bf16.msra.mxu0 %v2496
    %3049 = vmatpush.bf16.msra.mxu0 %v2491
    %3050 = vmatpush.bf16.msra.mxu0 %v2486
    %3051 = vmatmul.bf16.gmra.mxu0 %v835
    %v3052 = vpop.f32.mrf.mxu0
    %v3053 = vadd.f32 %v3040, %v3052
    %v3054 = vpop.f32.mrf.mxu0
    %3055 = vdwg.mxu0
    %3056 = vmatpush.bf16.msra.mxu0 %v2162
    %3057 = vmatpush.bf16.msra.mxu0 %v2157
    %3058 = vmatpush.bf16.msra.mxu0 %v2152
    %3059 = vmatpush.bf16.msra.mxu0 %v2147
    %3060 = vmatpush.bf16.msra.mxu0 %v2142
    %3061 = vmatpush.bf16.msra.mxu0 %v2137
    %3062 = vmatpush.bf16.msra.mxu0 %v2132
    %3063 = vmatpush.bf16.msra.mxu0 %v2127
    %3064 = vmatmul.bf16.gmra.mxu0 %v826
    %v3065 = vpop.f32.mrf.mxu0
    %v3066 = vadd.f32 0.0, %v3065
    %v3067 = vpop.f32.mrf.mxu0
    %3068 = vdwg.mxu0
    %3069 = vmatpush.bf16.msra.mxu0 %v2202
    %3070 = vmatpush.bf16.msra.mxu0 %v2197
    %3071 = vmatpush.bf16.msra.mxu0 %v2192
    %3072 = vmatpush.bf16.msra.mxu0 %v2187
    %3073 = vmatpush.bf16.msra.mxu0 %v2182
    %3074 = vmatpush.bf16.msra.mxu0 %v2177
    %3075 = vmatpush.bf16.msra.mxu0 %v2172
    %3076 = vmatpush.bf16.msra.mxu0 %v2167
    %3077 = vmatmul.bf16.gmra.mxu0 %v827
    %v3078 = vpop.f32.mrf.mxu0
    %v3079 = vadd.f32 %v3066, %v3078
    %v3080 = vpop.f32.mrf.mxu0
    %3081 = vdwg.mxu0
    %3082 = vmatpush.bf16.msra.mxu0 %v2242
    %3083 = vmatpush.bf16.msra.mxu0 %v2237
    %3084 = vmatpush.bf16.msra.mxu0 %v2232
    %3085 = vmatpush.bf16.msra.mxu0 %v2227
    %3086 = vmatpush.bf16.msra.mxu0 %v2222
    %3087 = vmatpush.bf16.msra.mxu0 %v2217
    %3088 = vmatpush.bf16.msra.mxu0 %v2212
    %3089 = vmatpush.bf16.msra.mxu0 %v2207
    %3090 = vmatmul.bf16.gmra.mxu0 %v828
    %v3091 = vpop.f32.mrf.mxu0
    %v3092 = vadd.f32 %v3079, %v3091
    %v3093 = vpop.f32.mrf.mxu0
    %3094 = vdwg.mxu0
    %3095 = vmatpush.bf16.msra.mxu0 %v2282
    %3096 = vmatpush.bf16.msra.mxu0 %v2277
    %3097 = vmatpush.bf16.msra.mxu0 %v2272
    %3098 = vmatpush.bf16.msra.mxu0 %v2267
    %3099 = vmatpush.bf16.msra.mxu0 %v2262
    %3100 = vmatpush.bf16.msra.mxu0 %v2257
    %3101 = vmatpush.bf16.msra.mxu0 %v2252
    %3102 = vmatpush.bf16.msra.mxu0 %v2247
    %3103 = vmatmul.bf16.gmra.mxu0 %v829
    %v3104 = vpop.f32.mrf.mxu0
    %v3105 = vadd.f32 %v3092, %v3104
    %v3106 = vpop.f32.mrf.mxu0
    %3107 = vdwg.mxu0
    %3108 = vmatpush.bf16.msra.mxu0 %v2322
    %3109 = vmatpush.bf16.msra.mxu0 %v2317
    %3110 = vmatpush.bf16.msra.mxu0 %v2312
    %3111 = vmatpush.bf16.msra.mxu0 %v2307
    %3112 = vmatpush.bf16.msra.mxu0 %v2302
    %3113 = vmatpush.bf16.msra.mxu0 %v2297
    %3114 = vmatpush.bf16.msra.mxu0 %v2292
    %3115 = vmatpush.bf16.msra.mxu0 %v2287
    %3116 = vmatmul.bf16.gmra.mxu0 %v830
    %v3117 = vpop.f32.mrf.mxu0
    %v3118 = vadd.f32 %v3105, %v3117
    %v3119 = vpop.f32.mrf.mxu0
    %3120 = vdwg.mxu0
    %3121 = vmatpush.bf16.msra.mxu0 %v2362
    %3122 = vmatpush.bf16.msra.mxu0 %v2357
    %3123 = vmatpush.bf16.msra.mxu0 %v2352
    %3124 = vmatpush.bf16.msra.mxu0 %v2347
    %3125 = vmatpush.bf16.msra.mxu0 %v2342
    %3126 = vmatpush.bf16.msra.mxu0 %v2337
    %3127 = vmatpush.bf16.msra.mxu0 %v2332
    %3128 = vmatpush.bf16.msra.mxu0 %v2327
    %3129 = vmatmul.bf16.gmra.mxu0 %v831
    %v3130 = vpop.f32.mrf.mxu0
    %v3131 = vadd.f32 %v3118, %v3130
    %v3132 = vpop.f32.mrf.mxu0
    %3133 = vdwg.mxu0
    %3134 = vmatpush.bf16.msra.mxu0 %v2402
    %3135 = vmatpush.bf16.msra.mxu0 %v2397
    %3136 = vmatpush.bf16.msra.mxu0 %v2392
    %3137 = vmatpush.bf16.msra.mxu0 %v2387
    %3138 = vmatpush.bf16.msra.mxu0 %v2382
    %3139 = vmatpush.bf16.msra.mxu0 %v2377
    %3140 = vmatpush.bf16.msra.mxu0 %v2372
    %3141 = vmatpush.bf16.msra.mxu0 %v2367
    %3142 = vmatmul.bf16.gmra.mxu0 %v832
    %v3143 = vpop.f32.mrf.mxu0
    %v3144 = vadd.f32 %v3131, %v3143
    %v3145 = vpop.f32.mrf.mxu0
    %3146 = vdwg.mxu0
    %3147 = vmatpush.bf16.msra.mxu0 %v2442
    %3148 = vmatpush.bf16.msra.mxu0 %v2437
    %3149 = vmatpush.bf16.msra.mxu0 %v2432
    %3150 = vmatpush.bf16.msra.mxu0 %v2427
    %3151 = vmatpush.bf16.msra.mxu0 %v2422
    %3152 = vmatpush.bf16.msra.mxu0 %v2417
    %3153 = vmatpush.bf16.msra.mxu0 %v2412
    %3154 = vmatpush.bf16.msra.mxu0 %v2407
    %3155 = vmatmul.bf16.gmra.mxu0 %v833
    %v3156 = vpop.f32.mrf.mxu0
    %v3157 = vadd.f32 %v3144, %v3156
    %v3158 = vpop.f32.mrf.mxu0
    %3159 = vdwg.mxu0
    %3160 = vmatpush.bf16.msra.mxu0 %v2482
    %3161 = vmatpush.bf16.msra.mxu0 %v2477
    %3162 = vmatpush.bf16.msra.mxu0 %v2472
    %3163 = vmatpush.bf16.msra.mxu0 %v2467
    %3164 = vmatpush.bf16.msra.mxu0 %v2462
    %3165 = vmatpush.bf16.msra.mxu0 %v2457
    %3166 = vmatpush.bf16.msra.mxu0 %v2452
    %3167 = vmatpush.bf16.msra.mxu0 %v2447
    %3168 = vmatmul.bf16.gmra.mxu0 %v834
    %v3169 = vpop.f32.mrf.mxu0
    %v3170 = vadd.f32 %v3157, %v3169
    %v3171 = vpop.f32.mrf.mxu0
    %3172 = vdwg.mxu0
    %3173 = vmatpush.bf16.msra.mxu0 %v2522
    %3174 = vmatpush.bf16.msra.mxu0 %v2517
    %3175 = vmatpush.bf16.msra.mxu0 %v2512
    %3176 = vmatpush.bf16.msra.mxu0 %v2507
    %3177 = vmatpush.bf16.msra.mxu0 %v2502
    %3178 = vmatpush.bf16.msra.mxu0 %v2497
    %3179 = vmatpush.bf16.msra.mxu0 %v2492
    %3180 = vmatpush.bf16.msra.mxu0 %v2487
    %3181 = vmatmul.bf16.gmra.mxu0 %v835
    %v3182 = vpop.f32.mrf.mxu0
    %v3183 = vadd.f32 %v3170, %v3182
    %v3184 = vpop.f32.mrf.mxu0
    %3185 = vdwg.mxu0
    %3186 = vmatpush.bf16.msra.mxu0 %v2163
    %3187 = vmatpush.bf16.msra.mxu0 %v2158
    %3188 = vmatpush.bf16.msra.mxu0 %v2153
    %3189 = vmatpush.bf16.msra.mxu0 %v2148
    %3190 = vmatpush.bf16.msra.mxu0 %v2143
    %3191 = vmatpush.bf16.msra.mxu0 %v2138
    %3192 = vmatpush.bf16.msra.mxu0 %v2133
    %3193 = vmatpush.bf16.msra.mxu0 %v2128
    %3194 = vmatmul.bf16.gmra.mxu0 %v826
    %v3195 = vpop.f32.mrf.mxu0
    %v3196 = vadd.f32 0.0, %v3195
    %v3197 = vpop.f32.mrf.mxu0
    %3198 = vdwg.mxu0
    %3199 = vmatpush.bf16.msra.mxu0 %v2203
    %3200 = vmatpush.bf16.msra.mxu0 %v2198
    %3201 = vmatpush.bf16.msra.mxu0 %v2193
    %3202 = vmatpush.bf16.msra.mxu0 %v2188
    %3203 = vmatpush.bf16.msra.mxu0 %v2183
    %3204 = vmatpush.bf16.msra.mxu0 %v2178
    %3205 = vmatpush.bf16.msra.mxu0 %v2173
    %3206 = vmatpush.bf16.msra.mxu0 %v2168
    %3207 = vmatmul.bf16.gmra.mxu0 %v827
    %v3208 = vpop.f32.mrf.mxu0
    %v3209 = vadd.f32 %v3196, %v3208
    %v3210 = vpop.f32.mrf.mxu0
    %3211 = vdwg.mxu0
    %3212 = vmatpush.bf16.msra.mxu0 %v2243
    %3213 = vmatpush.bf16.msra.mxu0 %v2238
    %3214 = vmatpush.bf16.msra.mxu0 %v2233
    %3215 = vmatpush.bf16.msra.mxu0 %v2228
    %3216 = vmatpush.bf16.msra.mxu0 %v2223
    %3217 = vmatpush.bf16.msra.mxu0 %v2218
    %3218 = vmatpush.bf16.msra.mxu0 %v2213
    %3219 = vmatpush.bf16.msra.mxu0 %v2208
    %3220 = vmatmul.bf16.gmra.mxu0 %v828
    %v3221 = vpop.f32.mrf.mxu0
    %v3222 = vadd.f32 %v3209, %v3221
    %v3223 = vpop.f32.mrf.mxu0
    %3224 = vdwg.mxu0
    %3225 = vmatpush.bf16.msra.mxu0 %v2283
    %3226 = vmatpush.bf16.msra.mxu0 %v2278
    %3227 = vmatpush.bf16.msra.mxu0 %v2273
    %3228 = vmatpush.bf16.msra.mxu0 %v2268
    %3229 = vmatpush.bf16.msra.mxu0 %v2263
    %3230 = vmatpush.bf16.msra.mxu0 %v2258
    %3231 = vmatpush.bf16.msra.mxu0 %v2253
    %3232 = vmatpush.bf16.msra.mxu0 %v2248
    %3233 = vmatmul.bf16.gmra.mxu0 %v829
    %v3234 = vpop.f32.mrf.mxu0
    %v3235 = vadd.f32 %v3222, %v3234
    %v3236 = vpop.f32.mrf.mxu0
    %3237 = vdwg.mxu0
    %3238 = vmatpush.bf16.msra.mxu0 %v2323
    %3239 = vmatpush.bf16.msra.mxu0 %v2318
    %3240 = vmatpush.bf16.msra.mxu0 %v2313
    %3241 = vmatpush.bf16.msra.mxu0 %v2308
    %3242 = vmatpush.bf16.msra.mxu0 %v2303
    %3243 = vmatpush.bf16.msra.mxu0 %v2298
    %3244 = vmatpush.bf16.msra.mxu0 %v2293
    %3245 = vmatpush.bf16.msra.mxu0 %v2288
    %3246 = vmatmul.bf16.gmra.mxu0 %v830
    %v3247 = vpop.f32.mrf.mxu0
    %v3248 = vadd.f32 %v3235, %v3247
    %v3249 = vpop.f32.mrf.mxu0
    %3250 = vdwg.mxu0
    %3251 = vmatpush.bf16.msra.mxu0 %v2363
    %3252 = vmatpush.bf16.msra.mxu0 %v2358
    %3253 = vmatpush.bf16.msra.mxu0 %v2353
    %3254 = vmatpush.bf16.msra.mxu0 %v2348
    %3255 = vmatpush.bf16.msra.mxu0 %v2343
    %3256 = vmatpush.bf16.msra.mxu0 %v2338
    %3257 = vmatpush.bf16.msra.mxu0 %v2333
    %3258 = vmatpush.bf16.msra.mxu0 %v2328
    %3259 = vmatmul.bf16.gmra.mxu0 %v831
    %v3260 = vpop.f32.mrf.mxu0
    %v3261 = vadd.f32 %v3248, %v3260
    %v3262 = vpop.f32.mrf.mxu0
    %3263 = vdwg.mxu0
    %3264 = vmatpush.bf16.msra.mxu0 %v2403
    %3265 = vmatpush.bf16.msra.mxu0 %v2398
    %3266 = vmatpush.bf16.msra.mxu0 %v2393
    %3267 = vmatpush.bf16.msra.mxu0 %v2388
    %3268 = vmatpush.bf16.msra.mxu0 %v2383
    %3269 = vmatpush.bf16.msra.mxu0 %v2378
    %3270 = vmatpush.bf16.msra.mxu0 %v2373
    %3271 = vmatpush.bf16.msra.mxu0 %v2368
    %3272 = vmatmul.bf16.gmra.mxu0 %v832
    %v3273 = vpop.f32.mrf.mxu0
    %v3274 = vadd.f32 %v3261, %v3273
    %v3275 = vpop.f32.mrf.mxu0
    %3276 = vdwg.mxu0
    %3277 = vmatpush.bf16.msra.mxu0 %v2443
    %3278 = vmatpush.bf16.msra.mxu0 %v2438
    %3279 = vmatpush.bf16.msra.mxu0 %v2433
    %3280 = vmatpush.bf16.msra.mxu0 %v2428
    %3281 = vmatpush.bf16.msra.mxu0 %v2423
    %3282 = vmatpush.bf16.msra.mxu0 %v2418
    %3283 = vmatpush.bf16.msra.mxu0 %v2413
    %3284 = vmatpush.bf16.msra.mxu0 %v2408
    %3285 = vmatmul.bf16.gmra.mxu0 %v833
    %v3286 = vpop.f32.mrf.mxu0
    %v3287 = vadd.f32 %v3274, %v3286
    %v3288 = vpop.f32.mrf.mxu0
    %3289 = vdwg.mxu0
    %3290 = vmatpush.bf16.msra.mxu0 %v2483
    %3291 = vmatpush.bf16.msra.mxu0 %v2478
    %3292 = vmatpush.bf16.msra.mxu0 %v2473
    %3293 = vmatpush.bf16.msra.mxu0 %v2468
    %3294 = vmatpush.bf16.msra.mxu0 %v2463
    %3295 = vmatpush.bf16.msra.mxu0 %v2458
    %3296 = vmatpush.bf16.msra.mxu0 %v2453
    %3297 = vmatpush.bf16.msra.mxu0 %v2448
    %3298 = vmatmul.bf16.gmra.mxu0 %v834
    %v3299 = vpop.f32.mrf.mxu0
    %v3300 = vadd.f32 %v3287, %v3299
    %v3301 = vpop.f32.mrf.mxu0
    %3302 = vdwg.mxu0
    %3303 = vmatpush.bf16.msra.mxu0 %v2523
    %3304 = vmatpush.bf16.msra.mxu0 %v2518
    %3305 = vmatpush.bf16.msra.mxu0 %v2513
    %3306 = vmatpush.bf16.msra.mxu0 %v2508
    %3307 = vmatpush.bf16.msra.mxu0 %v2503
    %3308 = vmatpush.bf16.msra.mxu0 %v2498
    %3309 = vmatpush.bf16.msra.mxu0 %v2493
    %3310 = vmatpush.bf16.msra.mxu0 %v2488
    %3311 = vmatmul.bf16.gmra.mxu0 %v835
    %v3312 = vpop.f32.mrf.mxu0
    %v3313 = vadd.f32 %v3300, %v3312
    %v3314 = vpop.f32.mrf.mxu0
    %3315 = vdwg.mxu0
    %3316 = vmatpush.bf16.msra.mxu0 %v2164
    %3317 = vmatpush.bf16.msra.mxu0 %v2159
    %3318 = vmatpush.bf16.msra.mxu0 %v2154
    %3319 = vmatpush.bf16.msra.mxu0 %v2149
    %3320 = vmatpush.bf16.msra.mxu0 %v2144
    %3321 = vmatpush.bf16.msra.mxu0 %v2139
    %3322 = vmatpush.bf16.msra.mxu0 %v2134
    %3323 = vmatpush.bf16.msra.mxu0 %v2129
    %3324 = vmatmul.bf16.gmra.mxu0 %v826
    %v3325 = vpop.f32.mrf.mxu0
    %v3326 = vadd.f32 0.0, %v3325
    %v3327 = vpop.f32.mrf.mxu0
    %3328 = vdwg.mxu0
    %3329 = vmatpush.bf16.msra.mxu0 %v2204
    %3330 = vmatpush.bf16.msra.mxu0 %v2199
    %3331 = vmatpush.bf16.msra.mxu0 %v2194
    %3332 = vmatpush.bf16.msra.mxu0 %v2189
    %3333 = vmatpush.bf16.msra.mxu0 %v2184
    %3334 = vmatpush.bf16.msra.mxu0 %v2179
    %3335 = vmatpush.bf16.msra.mxu0 %v2174
    %3336 = vmatpush.bf16.msra.mxu0 %v2169
    %3337 = vmatmul.bf16.gmra.mxu0 %v827
    %v3338 = vpop.f32.mrf.mxu0
    %v3339 = vadd.f32 %v3326, %v3338
    %v3340 = vpop.f32.mrf.mxu0
    %3341 = vdwg.mxu0
    %3342 = vmatpush.bf16.msra.mxu0 %v2244
    %3343 = vmatpush.bf16.msra.mxu0 %v2239
    %3344 = vmatpush.bf16.msra.mxu0 %v2234
    %3345 = vmatpush.bf16.msra.mxu0 %v2229
    %3346 = vmatpush.bf16.msra.mxu0 %v2224
    %3347 = vmatpush.bf16.msra.mxu0 %v2219
    %3348 = vmatpush.bf16.msra.mxu0 %v2214
    %3349 = vmatpush.bf16.msra.mxu0 %v2209
    %3350 = vmatmul.bf16.gmra.mxu0 %v828
    %v3351 = vpop.f32.mrf.mxu0
    %v3352 = vadd.f32 %v3339, %v3351
    %v3353 = vpop.f32.mrf.mxu0
    %3354 = vdwg.mxu0
    %3355 = vmatpush.bf16.msra.mxu0 %v2284
    %3356 = vmatpush.bf16.msra.mxu0 %v2279
    %3357 = vmatpush.bf16.msra.mxu0 %v2274
    %3358 = vmatpush.bf16.msra.mxu0 %v2269
    %3359 = vmatpush.bf16.msra.mxu0 %v2264
    %3360 = vmatpush.bf16.msra.mxu0 %v2259
    %3361 = vmatpush.bf16.msra.mxu0 %v2254
    %3362 = vmatpush.bf16.msra.mxu0 %v2249
    %3363 = vmatmul.bf16.gmra.mxu0 %v829
    %v3364 = vpop.f32.mrf.mxu0
    %v3365 = vadd.f32 %v3352, %v3364
    %v3366 = vpop.f32.mrf.mxu0
    %3367 = vdwg.mxu0
    %3368 = vmatpush.bf16.msra.mxu0 %v2324
    %3369 = vmatpush.bf16.msra.mxu0 %v2319
    %3370 = vmatpush.bf16.msra.mxu0 %v2314
    %3371 = vmatpush.bf16.msra.mxu0 %v2309
    %3372 = vmatpush.bf16.msra.mxu0 %v2304
    %3373 = vmatpush.bf16.msra.mxu0 %v2299
    %3374 = vmatpush.bf16.msra.mxu0 %v2294
    %3375 = vmatpush.bf16.msra.mxu0 %v2289
    %3376 = vmatmul.bf16.gmra.mxu0 %v830
    %v3377 = vpop.f32.mrf.mxu0
    %v3378 = vadd.f32 %v3365, %v3377
    %v3379 = vpop.f32.mrf.mxu0
    %3380 = vdwg.mxu0
    %3381 = vmatpush.bf16.msra.mxu0 %v2364
    %3382 = vmatpush.bf16.msra.mxu0 %v2359
    %3383 = vmatpush.bf16.msra.mxu0 %v2354
    %3384 = vmatpush.bf16.msra.mxu0 %v2349
    %3385 = vmatpush.bf16.msra.mxu0 %v2344
    %3386 = vmatpush.bf16.msra.mxu0 %v2339
    %3387 = vmatpush.bf16.msra.mxu0 %v2334
    %3388 = vmatpush.bf16.msra.mxu0 %v2329
    %3389 = vmatmul.bf16.gmra.mxu0 %v831
    %v3390 = vpop.f32.mrf.mxu0
    %v3391 = vadd.f32 %v3378, %v3390
    %v3392 = vpop.f32.mrf.mxu0
    %3393 = vdwg.mxu0
    %3394 = vmatpush.bf16.msra.mxu0 %v2404
    %3395 = vmatpush.bf16.msra.mxu0 %v2399
    %3396 = vmatpush.bf16.msra.mxu0 %v2394
    %3397 = vmatpush.bf16.msra.mxu0 %v2389
    %3398 = vmatpush.bf16.msra.mxu0 %v2384
    %3399 = vmatpush.bf16.msra.mxu0 %v2379
    %3400 = vmatpush.bf16.msra.mxu0 %v2374
    %3401 = vmatpush.bf16.msra.mxu0 %v2369
    %3402 = vmatmul.bf16.gmra.mxu0 %v832
    %v3403 = vpop.f32.mrf.mxu0
    %v3404 = vadd.f32 %v3391, %v3403
    %v3405 = vpop.f32.mrf.mxu0
    %3406 = vdwg.mxu0
    %3407 = vmatpush.bf16.msra.mxu0 %v2444
    %3408 = vmatpush.bf16.msra.mxu0 %v2439
    %3409 = vmatpush.bf16.msra.mxu0 %v2434
    %3410 = vmatpush.bf16.msra.mxu0 %v2429
    %3411 = vmatpush.bf16.msra.mxu0 %v2424
    %3412 = vmatpush.bf16.msra.mxu0 %v2419
    %3413 = vmatpush.bf16.msra.mxu0 %v2414
    %3414 = vmatpush.bf16.msra.mxu0 %v2409
    %3415 = vmatmul.bf16.gmra.mxu0 %v833
    %v3416 = vpop.f32.mrf.mxu0
    %v3417 = vadd.f32 %v3404, %v3416
    %v3418 = vpop.f32.mrf.mxu0
    %3419 = vdwg.mxu0
    %3420 = vmatpush.bf16.msra.mxu0 %v2484
    %3421 = vmatpush.bf16.msra.mxu0 %v2479
    %3422 = vmatpush.bf16.msra.mxu0 %v2474
    %3423 = vmatpush.bf16.msra.mxu0 %v2469
    %3424 = vmatpush.bf16.msra.mxu0 %v2464
    %3425 = vmatpush.bf16.msra.mxu0 %v2459
    %3426 = vmatpush.bf16.msra.mxu0 %v2454
    %3427 = vmatpush.bf16.msra.mxu0 %v2449
    %3428 = vmatmul.bf16.gmra.mxu0 %v834
    %v3429 = vpop.f32.mrf.mxu0
    %v3430 = vadd.f32 %v3417, %v3429
    %v3431 = vpop.f32.mrf.mxu0
    %3432 = vdwg.mxu0
    %3433 = vmatpush.bf16.msra.mxu0 %v2524
    %3434 = vmatpush.bf16.msra.mxu0 %v2519
    %3435 = vmatpush.bf16.msra.mxu0 %v2514
    %3436 = vmatpush.bf16.msra.mxu0 %v2509
    %3437 = vmatpush.bf16.msra.mxu0 %v2504
    %3438 = vmatpush.bf16.msra.mxu0 %v2499
    %3439 = vmatpush.bf16.msra.mxu0 %v2494
    %3440 = vmatpush.bf16.msra.mxu0 %v2489
    %3441 = vmatmul.bf16.gmra.mxu0 %v835
    %v3442 = vpop.f32.mrf.mxu0
    %v3443 = vadd.f32 %v3430, %v3442
    %v3444 = vpop.f32.mrf.mxu0
    %3445 = vdwg.mxu0
    %3446 = vmatpush.bf16.msra.mxu0 %v2165
    %3447 = vmatpush.bf16.msra.mxu0 %v2160
    %3448 = vmatpush.bf16.msra.mxu0 %v2155
    %3449 = vmatpush.bf16.msra.mxu0 %v2150
    %3450 = vmatpush.bf16.msra.mxu0 %v2145
    %3451 = vmatpush.bf16.msra.mxu0 %v2140
    %3452 = vmatpush.bf16.msra.mxu0 %v2135
    %3453 = vmatpush.bf16.msra.mxu0 %v2130
    %3454 = vmatmul.bf16.gmra.mxu0 %v826
    %v3455 = vpop.f32.mrf.mxu0
    %v3456 = vadd.f32 0.0, %v3455
    %v3457 = vpop.f32.mrf.mxu0
    %3458 = vdwg.mxu0
    %3459 = vmatpush.bf16.msra.mxu0 %v2205
    %3460 = vmatpush.bf16.msra.mxu0 %v2200
    %3461 = vmatpush.bf16.msra.mxu0 %v2195
    %3462 = vmatpush.bf16.msra.mxu0 %v2190
    %3463 = vmatpush.bf16.msra.mxu0 %v2185
    %3464 = vmatpush.bf16.msra.mxu0 %v2180
    %3465 = vmatpush.bf16.msra.mxu0 %v2175
    %3466 = vmatpush.bf16.msra.mxu0 %v2170
    %3467 = vmatmul.bf16.gmra.mxu0 %v827
    %v3468 = vpop.f32.mrf.mxu0
    %v3469 = vadd.f32 %v3456, %v3468
    %v3470 = vpop.f32.mrf.mxu0
    %3471 = vdwg.mxu0
    %3472 = vmatpush.bf16.msra.mxu0 %v2245
    %3473 = vmatpush.bf16.msra.mxu0 %v2240
    %3474 = vmatpush.bf16.msra.mxu0 %v2235
    %3475 = vmatpush.bf16.msra.mxu0 %v2230
    %3476 = vmatpush.bf16.msra.mxu0 %v2225
    %3477 = vmatpush.bf16.msra.mxu0 %v2220
    %3478 = vmatpush.bf16.msra.mxu0 %v2215
    %3479 = vmatpush.bf16.msra.mxu0 %v2210
    %3480 = vmatmul.bf16.gmra.mxu0 %v828
    %v3481 = vpop.f32.mrf.mxu0
    %v3482 = vadd.f32 %v3469, %v3481
    %v3483 = vpop.f32.mrf.mxu0
    %3484 = vdwg.mxu0
    %3485 = vmatpush.bf16.msra.mxu0 %v2285
    %3486 = vmatpush.bf16.msra.mxu0 %v2280
    %3487 = vmatpush.bf16.msra.mxu0 %v2275
    %3488 = vmatpush.bf16.msra.mxu0 %v2270
    %3489 = vmatpush.bf16.msra.mxu0 %v2265
    %3490 = vmatpush.bf16.msra.mxu0 %v2260
    %3491 = vmatpush.bf16.msra.mxu0 %v2255
    %3492 = vmatpush.bf16.msra.mxu0 %v2250
    %3493 = vmatmul.bf16.gmra.mxu0 %v829
    %v3494 = vpop.f32.mrf.mxu0
    %v3495 = vadd.f32 %v3482, %v3494
    %v3496 = vpop.f32.mrf.mxu0
    %3497 = vdwg.mxu0
    %3498 = vmatpush.bf16.msra.mxu0 %v2325
    %3499 = vmatpush.bf16.msra.mxu0 %v2320
    %3500 = vmatpush.bf16.msra.mxu0 %v2315
    %3501 = vmatpush.bf16.msra.mxu0 %v2310
    %3502 = vmatpush.bf16.msra.mxu0 %v2305
    %3503 = vmatpush.bf16.msra.mxu0 %v2300
    %3504 = vmatpush.bf16.msra.mxu0 %v2295
    %3505 = vmatpush.bf16.msra.mxu0 %v2290
    %3506 = vmatmul.bf16.gmra.mxu0 %v830
    %v3507 = vpop.f32.mrf.mxu0
    %v3508 = vadd.f32 %v3495, %v3507
    %v3509 = vpop.f32.mrf.mxu0
    %3510 = vdwg.mxu0
    %3511 = vmatpush.bf16.msra.mxu0 %v2365
    %3512 = vmatpush.bf16.msra.mxu0 %v2360
    %3513 = vmatpush.bf16.msra.mxu0 %v2355
    %3514 = vmatpush.bf16.msra.mxu0 %v2350
    %3515 = vmatpush.bf16.msra.mxu0 %v2345
    %3516 = vmatpush.bf16.msra.mxu0 %v2340
    %3517 = vmatpush.bf16.msra.mxu0 %v2335
    %3518 = vmatpush.bf16.msra.mxu0 %v2330
    %3519 = vmatmul.bf16.gmra.mxu0 %v831
    %v3520 = vpop.f32.mrf.mxu0
    %v3521 = vadd.f32 %v3508, %v3520
    %v3522 = vpop.f32.mrf.mxu0
    %3523 = vdwg.mxu0
    %3524 = vmatpush.bf16.msra.mxu0 %v2405
    %3525 = vmatpush.bf16.msra.mxu0 %v2400
    %3526 = vmatpush.bf16.msra.mxu0 %v2395
    %3527 = vmatpush.bf16.msra.mxu0 %v2390
    %3528 = vmatpush.bf16.msra.mxu0 %v2385
    %3529 = vmatpush.bf16.msra.mxu0 %v2380
    %3530 = vmatpush.bf16.msra.mxu0 %v2375
    %3531 = vmatpush.bf16.msra.mxu0 %v2370
    %3532 = vmatmul.bf16.gmra.mxu0 %v832
    %v3533 = vpop.f32.mrf.mxu0
    %v3534 = vadd.f32 %v3521, %v3533
    %v3535 = vpop.f32.mrf.mxu0
    %3536 = vdwg.mxu0
    %3537 = vmatpush.bf16.msra.mxu0 %v2445
    %3538 = vmatpush.bf16.msra.mxu0 %v2440
    %3539 = vmatpush.bf16.msra.mxu0 %v2435
    %3540 = vmatpush.bf16.msra.mxu0 %v2430
    %3541 = vmatpush.bf16.msra.mxu0 %v2425
    %3542 = vmatpush.bf16.msra.mxu0 %v2420
    %3543 = vmatpush.bf16.msra.mxu0 %v2415
    %3544 = vmatpush.bf16.msra.mxu0 %v2410
    %3545 = vmatmul.bf16.gmra.mxu0 %v833
    %v3546 = vpop.f32.mrf.mxu0
    %v3547 = vadd.f32 %v3534, %v3546
    %v3548 = vpop.f32.mrf.mxu0
    %3549 = vdwg.mxu0
    %3550 = vmatpush.bf16.msra.mxu0 %v2485
    %3551 = vmatpush.bf16.msra.mxu0 %v2480
    %3552 = vmatpush.bf16.msra.mxu0 %v2475
    %3553 = vmatpush.bf16.msra.mxu0 %v2470
    %3554 = vmatpush.bf16.msra.mxu0 %v2465
    %3555 = vmatpush.bf16.msra.mxu0 %v2460
    %3556 = vmatpush.bf16.msra.mxu0 %v2455
    %3557 = vmatpush.bf16.msra.mxu0 %v2450
    %3558 = vmatmul.bf16.gmra.mxu0 %v834
    %v3559 = vpop.f32.mrf.mxu0
    %v3560 = vadd.f32 %v3547, %v3559
    %v3561 = vpop.f32.mrf.mxu0
    %3562 = vdwg.mxu0
    %3563 = vmatpush.bf16.msra.mxu0 %v2525
    %3564 = vmatpush.bf16.msra.mxu0 %v2520
    %3565 = vmatpush.bf16.msra.mxu0 %v2515
    %3566 = vmatpush.bf16.msra.mxu0 %v2510
    %3567 = vmatpush.bf16.msra.mxu0 %v2505
    %3568 = vmatpush.bf16.msra.mxu0 %v2500
    %3569 = vmatpush.bf16.msra.mxu0 %v2495
    %3570 = vmatpush.bf16.msra.mxu0 %v2490
    %3571 = vmatmul.bf16.gmra.mxu0 %v835
    %v3572 = vpop.f32.mrf.mxu0
    %v3573 = vadd.f32 %v3560, %v3572
    %v3574 = vpop.f32.mrf.mxu0
    %3575 = vdwg.mxu0
    %p3576 = scmp.eq.s32.totalorder 0, 0
    // Predicated region
    $region14: #{tpu_custom_call.1} parent=1 // pred_check
      %p3577 = pneg %p3576
    $region15: #{tpu_custom_call.1} parent=1 // pred_check_branch
      %3579 = sbr.rel (%p3577) target = $region17
    $region16: #{tpu_custom_call.1} parent=1 // pred_region
      %v3584 = vrot.slane %v3183, 6
      %v3585 = vrot.slane %v3313, 4
      %v3586 = vrot.slane %v3443, 2
      %vm3587 = vcmask 1041408
      %v3588 = vsel %vm3587, %v3053, %v3584
      %vm3589 = vcmask 1045508
      %v3590 = vsel %vm3589, %v3585, %v3586
      %vm3591 = vcmask 1043456
      %v3592 = vsel %vm3591, %v3588, %v3590
      %3594 = vst [vmem:[#allocation2] sm:$0xff] %v3592
      %vm3595 = vcmask 115712
      %3596 = vst.msk [vmem:[#allocation2 + $0x8] sm:$0x3] %vm3595, %v3573
    $region17: #{tpu_custom_call.1} parent=1 // pred_fallthru
      _
    %p3597 = scmp.gt.s32.totalorder 0, 0
    // Predicated region
    $region18: #{tpu_custom_call.1} parent=1 // pred_check
      %p3598 = pneg %p3597
    $region19: #{tpu_custom_call.1} parent=1 // pred_check_branch
      %3600 = sbr.rel (%p3598) target = $region21
    $region20: #{tpu_custom_call.1} parent=1 // pred_region
      %v3601 = vld [vmem:[#allocation2] sm:$0xff]
      %v3602 = vld [vmem:[#allocation2 + $0x8] sm:$0x3]
      %v3607 = vrot.slane %v3183, 6
      %v3608 = vrot.slane %v3313, 4
      %v3609 = vrot.slane %v3443, 2
      %vm3610 = vcmask 1041408
      %v3611 = vsel %vm3610, %v3053, %v3607
      %vm3612 = vcmask 1045508
      %v3613 = vsel %vm3612, %v3608, %v3609
      %vm3614 = vcmask 1043456
      %v3615 = vsel %vm3614, %v3611, %v3613
      %v3617 = vadd.f32 %v3601, %v3615
      %v3618 = vadd.f32 %v3602, %v3573
      %3619 = vst [vmem:[#allocation2] sm:$0xff] %v3617
      %vm3620 = vcmask 115712
      %3621 = vst.msk [vmem:[#allocation2 + $0x8] sm:$0x3] %vm3620, %v3618
    $region21: #{tpu_custom_call.1} parent=1 // pred_fallthru
      _
    // Predicated region
    $region22: #{tpu_custom_call.1} parent=1 // pred_check
      %p3622 = pneg %p3576
    $region23: #{tpu_custom_call.1} parent=1 // pred_check_branch
      %3624 = sbr.rel (%p3622) target = $region25
    $region24: #{tpu_custom_call.1} parent=1 // pred_region
      %v3625 = vld [vmem:[#allocation2] sm:$0xff]
      %v3626 = vld [vmem:[#allocation2 + $0x8] sm:$0x3]
      %v3627 = vmul.f32 %v3625, 0.03125
      %v3628 = vmul.f32 %v3626, 0.03125
      %v3629 = vld [vmem:[%s2] sm:$0x1f]
      %v3631 = vperm.slane %v3629, 0
      %v3632 = vperm.slane %v3629, 1
      %v3633 = vperm.slane %v3629, 2
      %v3634 = vperm.slane %v3629, 3
      %v3635 = vperm.slane %v3629, 4
      %v3637 = vrot.slane %v3632, 6
      %v3638 = vrot.slane %v3633, 4
      %v3639 = vrot.slane %v3634, 2
      %vm3640 = vcmask 1041408
      %v3641 = vsel %vm3640, %v3631, %v3637
      %vm3642 = vcmask 1045508
      %v3643 = vsel %vm3642, %v3638, %v3639
      %vm3644 = vcmask 1043456
      %v3645 = vsel %vm3644, %v3641, %v3643
      %v3647 = vadd.f32 %v3627, %v3645
      %v3648 = vadd.f32 %v3628, %v3635
      %3649 = vst [vmem:[#allocation2] sm:$0xff] %v3647
      %vm3650 = vcmask 115712
      %3651 = vst.msk [vmem:[#allocation2 + $0x8] sm:$0x3] %vm3650, %v3648
    $region25: #{tpu_custom_call.1} parent=1 // pred_fallthru
      _
    // Predicated region
    $region26: #{tpu_custom_call.1} parent=1 // pred_check
      _
    $region27: #{tpu_custom_call.1} parent=1 // pred_check_branch
      %3653 = sbr.rel (0) target = $region29
    $region28: #{tpu_custom_call.1} parent=1 // pred_region
      %3655 = vsyncadd [#allocation3], 0
      %s3657 = sshll.u32 [#allocation2], 4
      %s3658 = int_to_ptr.vmem [resolvable:$true] %s3657
      %s3659 = sshll.u32 %s3, 4
      %s3660 = int_to_ptr.hbm [resolvable:$true] %s3659
      %3662 = dma.vmem_to_hbm [thread:$0]  %s3658, 160, %s3660, [#allocation3]
    $region29: #{tpu_custom_call.1} parent=1 // pred_fallthru
      _
    // Predicated region
    $region30: #{tpu_custom_call.1} parent=1 // pred_check
      _
    $region31: #{tpu_custom_call.1} parent=1 // pred_check_branch
      %3664 = sbr.rel (0) target = $region33
    $region32: #{tpu_custom_call.1} parent=1 // pred_region
      %3666 = dma.done [#allocation3], 160
    $region33: #{tpu_custom_call.1} parent=1 // pred_fallthru
      _
    %3667 = vsyncpa [#allocation3], 1

</llo_original>
